<compile_context>
chip_gen: v7x
topology: tpu7x:2x2x1
jax: 0.10.0
libtpu: 0.0.40
codegen_flags: <defaults>
</compile_context>

<pallas_src>
import jax
import jax.numpy as jnp
from jax.experimental import pallas as pl
from jax.experimental.pallas import tpu as pltpu

KW = 4          # Conv1d kernel_size
STRIDE = 2      # Conv1d stride (padding = 1)
N_CONV = 5
HIDDEN = 128
LANE = 128


def _cnn1d_kernel(x_ref,
                  wd1_ref, bd1_ref, wd2_ref, bd2_ref,
                  wd3_ref, bd3_ref, wd4_ref, bd4_ref,
                  wf_ref, bf_ref, w2_ref, b2_ref,
                  out_ref):
    """Fused forward for one batch tile.

    Activations are (features, TB) f32 slabs with the batch on lanes; every
    layer is a single resident-weight MXU matmul with bias (+ReLU) fused.
    """
    a = x_ref[...]                                               # (L*C, TB)
    for wd_ref, bd_ref in ((wd1_ref, bd1_ref), (wd2_ref, bd2_ref),
                           (wd3_ref, bd3_ref), (wd4_ref, bd4_ref)):
        # Conv1d(k=4, s=2, p=1) as a dense block-banded matrix; bias + ReLU fused.
        # TODO(synk): nn.Dropout(0.2) is identity in eval mode; no RNG path.
        a = jnp.dot(wd_ref[...], a,
                    preferred_element_type=jnp.float32) + bd_ref[...]
        a = jnp.maximum(a, 0.0)
    # conv5 (no ReLU) + channel-major Flatten + fc1, folded host-side into wf/bf.
    h = jnp.dot(wf_ref[...], a,
                preferred_element_type=jnp.float32) + bf_ref[...]   # (128, TB)
    # fc2 in batch-major orientation -> lane-dense (TB, 128) output store.
    o = jnp.dot(jnp.transpose(h), w2_ref[...],
                preferred_element_type=jnp.float32) + b2_ref[...]
    out_ref[...] = o.astype(out_ref.dtype)


def _conv_as_dense(w, b, l_in):
    """Lower Conv1d(kernel=4, stride=2, padding=1) to a dense matrix acting on a
    position-major flattened (l_in*C_in,) feature vector.

      dense[l*C_out + co, p*C_in + ci] = w[co, ci, p - 2*l + 1]   (when 0<=k<KW)
      bias [l*C_out + co]              = b[co]
    """
    c_out, c_in, _ = w.shape
    l_out = l_in // 2
    k = jnp.arange(l_in)[None, :] - STRIDE * jnp.arange(l_out)[:, None] + 1
    valid = (k >= 0) & (k < KW)
    kc = jnp.clip(k, 0, KW - 1)
    taps = jnp.where(valid[None, None, :, :], w[:, :, kc], 0.0)  # (co, ci, l, p)
    dense = jnp.transpose(taps, (2, 0, 3, 1)).reshape(l_out * c_out, l_in * c_in)
    bias = jnp.tile(b, l_out).reshape(l_out * c_out, 1)
    return dense, bias


def _fold_conv5_fc1(w5, b5, w1, b1, L16, L32, C):
    """Fold conv5 (no ReLU) + PyTorch's channel-major Flatten + fc1 into one
    linear map acting on the position-major (L16*C,) activation of conv4."""
    hp = jax.lax.Precision.HIGHEST
    # A[(m, ci), (co, l)] = w5[co, ci, k], k = m + 1 - 2*l   (padding=1, stride=2)
    k = jnp.arange(L16)[:, None] - STRIDE * jnp.arange(L32)[None, :] + 1
    valid = (k >= 0) & (k < KW)
    kc = jnp.clip(k, 0, KW - 1)
    taps = jnp.where(valid[None, None, :, :], w5[:, :, kc], 0.0)   # (co, ci, m, l)
    a_mat = jnp.transpose(taps, (2, 1, 0, 3)).reshape(L16 * C, C * L32)
    wf_t = jnp.dot(a_mat, w1, precision=hp).T                      # (HIDDEN, L16*C)
    bf = (jnp.dot(jnp.repeat(b5, L32), w1, precision=hp) + b1).reshape(HIDDEN, 1)
    return wf_t, bf


def cnn1d_forward(params, x):
    """x: (B, num_rows, num_columns) -- same input as the PyTorch module."""
    B, L, C = x.shape
    assert L % 32 == 0 and L >= 32, "num_rows must be a positive multiple of 32"
    L32, L16 = L // 32, L // 16

    dense_bytes = 4 * sum((L >> (i + 1)) * C * (L >> i) * C for i in range(N_CONV - 1))
    assert dense_bytes <= 12 * 1024 * 1024, (
        "dense-conv lowering is sized for this module's small feature maps; "
        f"conv matrices would need {dense_bytes} bytes of VMEM")

    # Conv1..conv4 as dense block-banded matrices (+ bias columns), VMEM-resident.
    wds, bds = [], []
    l_in = L
    for i in range(N_CONV - 1):
        w, b = params[f"conv{i + 1}"]
        wd, bd = _conv_as_dense(w, b, l_in)
        wds.append(wd)
        bds.append(bd)
        l_in //= 2

    # conv5 + channel-major Flatten + fc1 folded into one matrix.
    w5, b5 = params["conv5"]
    w1, b1 = params["fc1"]
    wf_t, bf = _fold_conv5_fc1(w5, b5, w1, b1, L16, L32, C)

    # fc2, padded to 128 output lanes for a dense final store.
    w2, b2 = params["fc2"]
    nc = w2.shape[1]
    nc_pad = ((nc + LANE - 1) // LANE) * LANE
    w2p = jnp.pad(w2, ((0, 0), (0, nc_pad - nc)))
    b2p = jnp.pad(b2, (0, nc_pad - nc)).reshape(1, nc_pad)

    # Batch tiling: batch on the lane axis.  TB = min(B, 128) so batches > 128
    # give >= 2 "parallel" grid steps (v7x megacore sharding).
    if B <= LANE:
        tb, b_pad = B, B
    else:
        tb = LANE
        b_pad = pl.cdiv(B, tb) * tb
    n_tiles = b_pad // tb

    x_t = x.astype(jnp.float32).reshape(B, L * C).T              # (L*C, B), row = pos*C + ci
    if b_pad != B:
        x_t = jnp.pad(x_t, ((0, 0), (0, b_pad - B)))

    flops = n_tiles * (sum(2 * wd.shape[0] * wd.shape[1] * tb for wd in wds)
                       + 2 * HIDDEN * (L16 * C) * tb
                       + 2 * tb * HIDDEN * nc_pad)
    bytes_accessed = 4 * (x_t.size + sum(w.size for w in wds)
                          + sum(b.size for b in bds)
                          + wf_t.size + bf.size + w2p.size + b2p.size
                          + b_pad * nc_pad)

    resident = lambda i: (0, 0)   # constant index_map: weights DMA'd once, stay in VMEM
    in_specs = [pl.BlockSpec((L * C, tb), lambda i: (0, i))]     # per-tile input slab
    for wd, bd in zip(wds, bds):
        in_specs.append(pl.BlockSpec(wd.shape, resident))
        in_specs.append(pl.BlockSpec(bd.shape, resident))
    in_specs += [pl.BlockSpec(wf_t.shape, resident),
                 pl.BlockSpec(bf.shape, resident),
                 pl.BlockSpec(w2p.shape, resident),
                 pl.BlockSpec(b2p.shape, resident)]

    out = pl.pallas_call(
        _cnn1d_kernel,
        out_shape=jax.ShapeDtypeStruct((b_pad, nc_pad), jnp.float32),
        grid_spec=pltpu.PrefetchScalarGridSpec(
            num_scalar_prefetch=0,
            grid=(n_tiles,),
            in_specs=in_specs,
            out_specs=pl.BlockSpec((tb, nc_pad), lambda i: (i, 0)),
        ),
        compiler_params=pltpu.CompilerParams(
            dimension_semantics=("parallel",),
            vmem_limit_bytes=32 * 1024 * 1024),
        cost_estimate=pl.CostEstimate(flops=int(flops), transcendentals=0,
                                      bytes_accessed=int(bytes_accessed)),
    )(x_t, wds[0], bds[0], wds[1], bds[1], wds[2], bds[2], wds[3], bds[3],
      wf_t, bf, w2p, b2p)
    return out[:B, :nc]


def init_params(key, num_rows, num_columns, num_classes):
    C = num_columns
    keys = jax.random.split(key, 14)

    def uinit(k, shape, fan_in):
        bound = 1.0 / jnp.sqrt(jnp.float32(fan_in))
        return jax.random.uniform(k, shape, jnp.float32, -bound, bound)

    params = {}
    for i in range(N_CONV):
        kw, kb = keys[2 * i], keys[2 * i + 1]
        params[f"conv{i + 1}"] = (uinit(kw, (C, C, KW), C * KW),
                                  uinit(kb, (C,), C * KW))
    flat = (num_rows // 32) * C
    params["fc1"] = (uinit(keys[10], (flat, HIDDEN), flat),
                     uinit(keys[11], (HIDDEN,), flat))
    params["fc2"] = (uinit(keys[12], (HIDDEN, num_classes), HIDDEN),
                     uinit(keys[13], (num_classes,), HIDDEN))
    return params


def _reference_forward(params, x):
    """Pure-JAX mirror of the PyTorch module (for correctness checking)."""
    B, L, C = x.shape
    a = jnp.transpose(x, (0, 2, 1))                         # (B, C, L)
    for i in range(N_CONV):
        w, b = params[f"conv{i + 1}"]
        ap = jnp.pad(a, ((0, 0), (0, 0), (1, 1)))
        L_out = a.shape[2] // 2
        idx = STRIDE * jnp.arange(L_out)[:, None] + jnp.arange(KW)[None, :]
        patches = ap[:, :, idx]                             # (B, C, L_out, KW)
        y = jnp.einsum('bclk,ock->bol', patches, w,
                       precision=jax.lax.Precision.HIGHEST) + b[None, :, None]
        a = y if i == N_CONV - 1 else jnp.maximum(y, 0.0)
    flat = a.reshape(B, -1)                                 # channel-major flatten
    w1, b1 = params["fc1"]
    w2, b2 = params["fc2"]
    h = jnp.dot(flat, w1, precision=jax.lax.Precision.HIGHEST) + b1
    return jnp.dot(h, w2, precision=jax.lax.Precision.HIGHEST) + b2


if __name__ == "__main__":
    B, num_rows, num_columns, num_classes = 2, 64, 8, 10
    key = jax.random.PRNGKey(0)
    k_param, k_x = jax.random.split(key)
    params = init_params(k_param, num_rows, num_columns, num_classes)
    x = jax.random.normal(k_x, (B, num_rows, num_columns), dtype=jnp.float32)

    out = jax.block_until_ready(jax.jit(cnn1d_forward)(params, x))
    assert out.shape == (B, num_classes), out.shape
    assert bool(jnp.all(jnp.isfinite(out))), "non-finite output"

    ref = _reference_forward(params, x)
    err = float(jnp.max(jnp.abs(out - ref)))
    assert jnp.allclose(out, ref, rtol=1e-3, atol=2e-3), f"max abs err {err}"

    print("KERNEL_OK")
</pallas_src>

<mosaic_0001>
module attributes {stable_mosaic.version = 11 : i64} {
  func.func @_cnn1d_kernel(%arg0: i32, %arg1: memref<512x2xf32, #tpu.memory_space<vmem>>, %arg2: memref<256x512xf32, #tpu.memory_space<vmem>>, %arg3: memref<256x1xf32, #tpu.memory_space<vmem>>, %arg4: memref<128x256xf32, #tpu.memory_space<vmem>>, %arg5: memref<128x1xf32, #tpu.memory_space<vmem>>, %arg6: memref<64x128xf32, #tpu.memory_space<vmem>>, %arg7: memref<64x1xf32, #tpu.memory_space<vmem>>, %arg8: memref<32x64xf32, #tpu.memory_space<vmem>>, %arg9: memref<32x1xf32, #tpu.memory_space<vmem>>, %arg10: memref<128x32xf32, #tpu.memory_space<vmem>>, %arg11: memref<128x1xf32, #tpu.memory_space<vmem>>, %arg12: memref<128x128xf32, #tpu.memory_space<vmem>>, %arg13: memref<1x128xf32, #tpu.memory_space<vmem>>, %arg14: memref<2x128xf32, #tpu.memory_space<vmem>>) attributes {dimension_semantics = [#tpu.dimension_semantics<parallel>], iteration_bounds = array<i64: 1>, scalar_prefetch = 0 : i64, scratch_operands = 0 : i64, tpu.core_type = #tpu.core_type<tc>, window_params = [{transform_indices = @transform_0, window_bounds = array<i64: 512, 2>}, {pipeline_mode = #tpu.pipeline_mode<synchronous>, transform_indices = @transform_1, window_bounds = array<i64: 256, 512>}, {pipeline_mode = #tpu.pipeline_mode<synchronous>, transform_indices = @transform_2, window_bounds = array<i64: 256, 1>}, {pipeline_mode = #tpu.pipeline_mode<synchronous>, transform_indices = @transform_3, window_bounds = array<i64: 128, 256>}, {pipeline_mode = #tpu.pipeline_mode<synchronous>, transform_indices = @transform_4, window_bounds = array<i64: 128, 1>}, {pipeline_mode = #tpu.pipeline_mode<synchronous>, transform_indices = @transform_5, window_bounds = array<i64: 64, 128>}, {pipeline_mode = #tpu.pipeline_mode<synchronous>, transform_indices = @transform_6, window_bounds = array<i64: 64, 1>}, {pipeline_mode = #tpu.pipeline_mode<synchronous>, transform_indices = @transform_7, window_bounds = array<i64: 32, 64>}, {pipeline_mode = #tpu.pipeline_mode<synchronous>, transform_indices = @transform_8, window_bounds = array<i64: 32, 1>}, {pipeline_mode = #tpu.pipeline_mode<synchronous>, transform_indices = @transform_9, window_bounds = array<i64: 128, 32>}, {pipeline_mode = #tpu.pipeline_mode<synchronous>, transform_indices = @transform_10, window_bounds = array<i64: 128, 1>}, {pipeline_mode = #tpu.pipeline_mode<synchronous>, transform_indices = @transform_11, window_bounds = array<i64: 128, 128>}, {pipeline_mode = #tpu.pipeline_mode<synchronous>, transform_indices = @transform_12, window_bounds = array<i64: 1, 128>}, {transform_indices = @transform_13, window_bounds = array<i64: 2, 128>}]} {
    %c0 = arith.constant 0 : index
    %c0_0 = arith.constant 0 : index
    %0 = vector.load %arg1[%c0, %c0_0] : memref<512x2xf32, #tpu.memory_space<vmem>>, vector<512x2xf32>
    %c0_1 = arith.constant 0 : index
    %c0_2 = arith.constant 0 : index
    %1 = vector.load %arg2[%c0_1, %c0_2] : memref<256x512xf32, #tpu.memory_space<vmem>>, vector<256x512xf32>
    %cst = arith.constant dense<0.000000e+00> : vector<256x2xf32>
    %2 = tpu.matmul %1, %0, %cst {dimension_numbers = #tpu.dot_dimension_numbers<[1], [0], [0], [1], [0, 0, 1, 1], [], []>} : vector<256x512xf32>, vector<512x2xf32>, vector<256x2xf32> -> vector<256x2xf32>
    %c0_3 = arith.constant 0 : index
    %c0_4 = arith.constant 0 : index
    %3 = vector.load %arg3[%c0_3, %c0_4] : memref<256x1xf32, #tpu.memory_space<vmem>>, vector<256x1xf32>
    %4 = vector.broadcast %3 : vector<256x1xf32> to vector<256x2xf32>
    %5 = arith.addf %2, %4 : vector<256x2xf32>
    %cst_5 = arith.constant 0.000000e+00 : f32
    %6 = vector.broadcast %cst_5 : f32 to vector<256x2xf32>
    %7 = arith.maximumf %5, %6 : vector<256x2xf32>
    %c0_6 = arith.constant 0 : index
    %c0_7 = arith.constant 0 : index
    %8 = vector.load %arg4[%c0_6, %c0_7] : memref<128x256xf32, #tpu.memory_space<vmem>>, vector<128x256xf32>
    %cst_8 = arith.constant dense<0.000000e+00> : vector<128x2xf32>
    %9 = tpu.matmul %8, %7, %cst_8 {dimension_numbers = #tpu.dot_dimension_numbers<[1], [0], [0], [1], [0, 0, 1, 1], [], []>} : vector<128x256xf32>, vector<256x2xf32>, vector<128x2xf32> -> vector<128x2xf32>
    %c0_9 = arith.constant 0 : index
    %c0_10 = arith.constant 0 : index
    %10 = vector.load %arg5[%c0_9, %c0_10] : memref<128x1xf32, #tpu.memory_space<vmem>>, vector<128x1xf32>
    %11 = vector.broadcast %10 : vector<128x1xf32> to vector<128x2xf32>
    %12 = arith.addf %9, %11 : vector<128x2xf32>
    %cst_11 = arith.constant 0.000000e+00 : f32
    %13 = vector.broadcast %cst_11 : f32 to vector<128x2xf32>
    %14 = arith.maximumf %12, %13 : vector<128x2xf32>
    %c0_12 = arith.constant 0 : index
    %c0_13 = arith.constant 0 : index
    %15 = vector.load %arg6[%c0_12, %c0_13] : memref<64x128xf32, #tpu.memory_space<vmem>>, vector<64x128xf32>
    %cst_14 = arith.constant dense<0.000000e+00> : vector<64x2xf32>
    %16 = tpu.matmul %15, %14, %cst_14 {dimension_numbers = #tpu.dot_dimension_numbers<[1], [0], [0], [1], [0, 0, 1, 1], [], []>} : vector<64x128xf32>, vector<128x2xf32>, vector<64x2xf32> -> vector<64x2xf32>
    %c0_15 = arith.constant 0 : index
    %c0_16 = arith.constant 0 : index
    %17 = vector.load %arg7[%c0_15, %c0_16] : memref<64x1xf32, #tpu.memory_space<vmem>>, vector<64x1xf32>
    %18 = vector.broadcast %17 : vector<64x1xf32> to vector<64x2xf32>
    %19 = arith.addf %16, %18 : vector<64x2xf32>
    %cst_17 = arith.constant 0.000000e+00 : f32
    %20 = vector.broadcast %cst_17 : f32 to vector<64x2xf32>
    %21 = arith.maximumf %19, %20 : vector<64x2xf32>
    %c0_18 = arith.constant 0 : index
    %c0_19 = arith.constant 0 : index
    %22 = vector.load %arg8[%c0_18, %c0_19] : memref<32x64xf32, #tpu.memory_space<vmem>>, vector<32x64xf32>
    %cst_20 = arith.constant dense<0.000000e+00> : vector<32x2xf32>
    %23 = tpu.matmul %22, %21, %cst_20 {dimension_numbers = #tpu.dot_dimension_numbers<[1], [0], [0], [1], [0, 0, 1, 1], [], []>} : vector<32x64xf32>, vector<64x2xf32>, vector<32x2xf32> -> vector<32x2xf32>
    %c0_21 = arith.constant 0 : index
    %c0_22 = arith.constant 0 : index
    %24 = vector.load %arg9[%c0_21, %c0_22] : memref<32x1xf32, #tpu.memory_space<vmem>>, vector<32x1xf32>
    %25 = vector.broadcast %24 : vector<32x1xf32> to vector<32x2xf32>
    %26 = arith.addf %23, %25 : vector<32x2xf32>
    %cst_23 = arith.constant 0.000000e+00 : f32
    %27 = vector.broadcast %cst_23 : f32 to vector<32x2xf32>
    %28 = arith.maximumf %26, %27 : vector<32x2xf32>
    %c0_24 = arith.constant 0 : index
    %c0_25 = arith.constant 0 : index
    %29 = vector.load %arg10[%c0_24, %c0_25] : memref<128x32xf32, #tpu.memory_space<vmem>>, vector<128x32xf32>
    %cst_26 = arith.constant dense<0.000000e+00> : vector<128x2xf32>
    %30 = tpu.matmul %29, %28, %cst_26 {dimension_numbers = #tpu.dot_dimension_numbers<[1], [0], [0], [1], [0, 0, 1, 1], [], []>} : vector<128x32xf32>, vector<32x2xf32>, vector<128x2xf32> -> vector<128x2xf32>
    %c0_27 = arith.constant 0 : index
    %c0_28 = arith.constant 0 : index
    %31 = vector.load %arg11[%c0_27, %c0_28] : memref<128x1xf32, #tpu.memory_space<vmem>>, vector<128x1xf32>
    %32 = vector.broadcast %31 : vector<128x1xf32> to vector<128x2xf32>
    %33 = arith.addf %30, %32 : vector<128x2xf32>
    %34 = tpu.transpose %33, [1, 0] : vector<128x2xf32> -> vector<2x128xf32>
    %c0_29 = arith.constant 0 : index
    %c0_30 = arith.constant 0 : index
    %35 = vector.load %arg12[%c0_29, %c0_30] : memref<128x128xf32, #tpu.memory_space<vmem>>, vector<128x128xf32>
    %cst_31 = arith.constant dense<0.000000e+00> : vector<2x128xf32>
    %36 = tpu.matmul %34, %35, %cst_31 {dimension_numbers = #tpu.dot_dimension_numbers<[1], [0], [0], [1], [0, 0, 1, 1], [], []>} : vector<2x128xf32>, vector<128x128xf32>, vector<2x128xf32> -> vector<2x128xf32>
    %c0_32 = arith.constant 0 : index
    %c0_33 = arith.constant 0 : index
    %37 = vector.load %arg13[%c0_32, %c0_33] : memref<1x128xf32, #tpu.memory_space<vmem>>, vector<1x128xf32>
    %38 = vector.broadcast %37 : vector<1x128xf32> to vector<2x128xf32>
    %39 = arith.addf %36, %38 : vector<2x128xf32>
    %c0_34 = arith.constant 0 : index
    %c0_35 = arith.constant 0 : index
    %40 = vector.load %arg14[%c0_34, %c0_35] : memref<2x128xf32, #tpu.memory_space<vmem>>, vector<2x128xf32>
    tpu.vector_store %arg14[%c0_34, %c0_35], %39 {strides = array<i32>} : memref<2x128xf32, #tpu.memory_space<vmem>>, vector<2x128xf32>,
    return
  }
  func.func @transform_0(%arg0: i32) -> (i32, i32) {
    %c0_i32 = arith.constant 0 : i32
    %c0_i32_0 = arith.constant 0 : i32
    return %c0_i32, %arg0 : i32, i32
  }
  func.func @transform_1(%arg0: i32) -> (i32, i32) {
    %c0_i32 = arith.constant 0 : i32
    %c0_i32_0 = arith.constant 0 : i32
    %c0_i32_1 = arith.constant 0 : i32
    return %c0_i32, %c0_i32_0 : i32, i32
  }
  func.func @transform_2(%arg0: i32) -> (i32, i32) {
    %c0_i32 = arith.constant 0 : i32
    %c0_i32_0 = arith.constant 0 : i32
    %c0_i32_1 = arith.constant 0 : i32
    return %c0_i32, %c0_i32_0 : i32, i32
  }
  func.func @transform_3(%arg0: i32) -> (i32, i32) {
    %c0_i32 = arith.constant 0 : i32
    %c0_i32_0 = arith.constant 0 : i32
    %c0_i32_1 = arith.constant 0 : i32
    return %c0_i32, %c0_i32_0 : i32, i32
  }
  func.func @transform_4(%arg0: i32) -> (i32, i32) {
    %c0_i32 = arith.constant 0 : i32
    %c0_i32_0 = arith.constant 0 : i32
    %c0_i32_1 = arith.constant 0 : i32
    return %c0_i32, %c0_i32_0 : i32, i32
  }
  func.func @transform_5(%arg0: i32) -> (i32, i32) {
    %c0_i32 = arith.constant 0 : i32
    %c0_i32_0 = arith.constant 0 : i32
    %c0_i32_1 = arith.constant 0 : i32
    return %c0_i32, %c0_i32_0 : i32, i32
  }
  func.func @transform_6(%arg0: i32) -> (i32, i32) {
    %c0_i32 = arith.constant 0 : i32
    %c0_i32_0 = arith.constant 0 : i32
    %c0_i32_1 = arith.constant 0 : i32
    return %c0_i32, %c0_i32_0 : i32, i32
  }
  func.func @transform_7(%arg0: i32) -> (i32, i32) {
    %c0_i32 = arith.constant 0 : i32
    %c0_i32_0 = arith.constant 0 : i32
    %c0_i32_1 = arith.constant 0 : i32
    return %c0_i32, %c0_i32_0 : i32, i32
  }
  func.func @transform_8(%arg0: i32) -> (i32, i32) {
    %c0_i32 = arith.constant 0 : i32
    %c0_i32_0 = arith.constant 0 : i32
    %c0_i32_1 = arith.constant 0 : i32
    return %c0_i32, %c0_i32_0 : i32, i32
  }
  func.func @transform_9(%arg0: i32) -> (i32, i32) {
    %c0_i32 = arith.constant 0 : i32
    %c0_i32_0 = arith.constant 0 : i32
    %c0_i32_1 = arith.constant 0 : i32
    return %c0_i32, %c0_i32_0 : i32, i32
  }
  func.func @transform_10(%arg0: i32) -> (i32, i32) {
    %c0_i32 = arith.constant 0 : i32
    %c0_i32_0 = arith.constant 0 : i32
    %c0_i32_1 = arith.constant 0 : i32
    return %c0_i32, %c0_i32_0 : i32, i32
  }
  func.func @transform_11(%arg0: i32) -> (i32, i32) {
    %c0_i32 = arith.constant 0 : i32
    %c0_i32_0 = arith.constant 0 : i32
    %c0_i32_1 = arith.constant 0 : i32
    return %c0_i32, %c0_i32_0 : i32, i32
  }
  func.func @transform_12(%arg0: i32) -> (i32, i32) {
    %c0_i32 = arith.constant 0 : i32
    %c0_i32_0 = arith.constant 0 : i32
    %c0_i32_1 = arith.constant 0 : i32
    return %c0_i32, %c0_i32_0 : i32, i32
  }
  func.func @transform_13(%arg0: i32) -> (i32, i32) {
    %c0_i32 = arith.constant 0 : i32
    %c0_i32_0 = arith.constant 0 : i32
    return %arg0, %c0_i32 : i32, i32
  }
}

</mosaic_0001>

<llo_original>
// kernel: tile.23
$region0: #{tile.23}
  #allocation0 [shape = 's32[1]{0}', space=sflag, size = 0x4, scoped, tag = 'scoped memory for tile.23']
  %s0 = inlined_call_operand.vmem [shape: f32[8], index: 0, kind: input, shape index: {}]
  %s1 = inlined_call_operand.vmem [shape: f32[32,8], index: 1, kind: output, shape index: {}]
  // Predicated region
  $region2: #{tile.23} parent=0 // pred_check
    _
  $region3: #{tile.23} parent=0 // pred_check_branch
    %3 = sbr.rel (0) target = $region5
  $region4: #{tile.23} parent=0 // pred_region
    _
  $region5: #{tile.23} parent=0 // pred_fallthru
    _
  %v4 = vld [vmem:[%s0] ss:$0 sm:$0xff]
  %5 = vst [vmem:[%s1] sm:$0xff] %v4
  %s6 = scalar_lea.vmem %s1, 8
  %7 = vst [vmem:[%s6] sm:$0xff] %v4
  %s8 = scalar_lea.vmem %s1, 16
  %9 = vst [vmem:[%s8] sm:$0xff] %v4
  %s10 = scalar_lea.vmem %s1, 24
  %11 = vst [vmem:[%s10] sm:$0xff] %v4

// kernel: tile.0
$region0: #{tile.0}
  %s0 = inlined_call_operand.vmem [shape: f32[32,8], index: 0, kind: input, shape index: {}]
  %s1 = inlined_call_operand.vmem [shape: f32[256,1], index: 1, kind: output, shape index: {}]
  %v2 = vld [vmem:[%s0] sm:$0xff]
  %vm3 = vcmask 7168
  %4 = vst.msk [vmem:[%s1] ss:$8 sm:$0xf] %vm3, %v2
  %5 = vst.msk [vmem:[%s1] ss:$8 sm:$0xf0] %vm3, %v2
  %s6 = scalar_lea.vmem %s0, 8
  %v7 = vld [vmem:[%s6] sm:$0xff]
  %vm8 = vcmask 7168
  %s9 = scalar_lea.vmem %s1, 64
  %10 = vst.msk [vmem:[%s9] ss:$8 sm:$0xf] %vm8, %v7
  %s11 = scalar_lea.vmem %s1, 64
  %12 = vst.msk [vmem:[%s11] ss:$8 sm:$0xf0] %vm8, %v7
  %s13 = scalar_lea.vmem %s0, 16
  %v14 = vld [vmem:[%s13] sm:$0xff]
  %vm15 = vcmask 7168
  %s16 = scalar_lea.vmem %s1, 128
  %17 = vst.msk [vmem:[%s16] ss:$8 sm:$0xf] %vm15, %v14
  %s18 = scalar_lea.vmem %s1, 128
  %19 = vst.msk [vmem:[%s18] ss:$8 sm:$0xf0] %vm15, %v14
  %s20 = scalar_lea.vmem %s0, 24
  %v21 = vld [vmem:[%s20] sm:$0xff]
  %vm22 = vcmask 7168
  %s23 = scalar_lea.vmem %s1, 192
  %24 = vst.msk [vmem:[%s23] ss:$8 sm:$0xf] %vm22, %v21
  %s25 = scalar_lea.vmem %s1, 192
  %26 = vst.msk [vmem:[%s25] ss:$8 sm:$0xf0] %vm22, %v21
  %v27 = vld [vmem:[%s0] sm:$0xff]
  %28 = vrot.lane.b32.xlu0 %v27, 127
  %v29 = vpop.permute.xlu0 %28
  %vm30 = vcmask 7168
  %s31 = scalar_lea.vmem %s1, 1
  %32 = vst.msk [vmem:[%s31] ss:$8 sm:$0xf] %vm30, %v29
  %s33 = scalar_lea.vmem %s1, 1
  %34 = vst.msk [vmem:[%s33] ss:$8 sm:$0xf0] %vm30, %v29
  %s35 = scalar_lea.vmem %s0, 8
  %v36 = vld [vmem:[%s35] sm:$0xff]
  %37 = vrot.lane.b32.xlu0 %v36, 127
  %v38 = vpop.permute.xlu0 %37
  %vm39 = vcmask 7168
  %s40 = scalar_lea.vmem %s1, 65
  %41 = vst.msk [vmem:[%s40] ss:$8 sm:$0xf] %vm39, %v38
  %s42 = scalar_lea.vmem %s1, 65
  %43 = vst.msk [vmem:[%s42] ss:$8 sm:$0xf0] %vm39, %v38
  %s44 = scalar_lea.vmem %s0, 16
  %v45 = vld [vmem:[%s44] sm:$0xff]
  %46 = vrot.lane.b32.xlu0 %v45, 127
  %v47 = vpop.permute.xlu0 %46
  %vm48 = vcmask 7168
  %s49 = scalar_lea.vmem %s1, 129
  %50 = vst.msk [vmem:[%s49] ss:$8 sm:$0xf] %vm48, %v47
  %s51 = scalar_lea.vmem %s1, 129
  %52 = vst.msk [vmem:[%s51] ss:$8 sm:$0xf0] %vm48, %v47
  %s53 = scalar_lea.vmem %s0, 24
  %v54 = vld [vmem:[%s53] sm:$0xff]
  %55 = vrot.lane.b32.xlu0 %v54, 127
  %v56 = vpop.permute.xlu0 %55
  %vm57 = vcmask 7168
  %s58 = scalar_lea.vmem %s1, 193
  %59 = vst.msk [vmem:[%s58] ss:$8 sm:$0xf] %vm57, %v56
  %s60 = scalar_lea.vmem %s1, 193
  %61 = vst.msk [vmem:[%s60] ss:$8 sm:$0xf0] %vm57, %v56
  %v62 = vld [vmem:[%s0] sm:$0xff]
  %63 = vrot.lane.b32.xlu0 %v62, 126
  %v64 = vpop.permute.xlu0 %63
  %vm65 = vcmask 7168
  %s66 = scalar_lea.vmem %s1, 2
  %67 = vst.msk [vmem:[%s66] ss:$8 sm:$0xf] %vm65, %v64
  %s68 = scalar_lea.vmem %s1, 2
  %69 = vst.msk [vmem:[%s68] ss:$8 sm:$0xf0] %vm65, %v64
  %s70 = scalar_lea.vmem %s0, 8
  %v71 = vld [vmem:[%s70] sm:$0xff]
  %72 = vrot.lane.b32.xlu0 %v71, 126
  %v73 = vpop.permute.xlu0 %72
  %vm74 = vcmask 7168
  %s75 = scalar_lea.vmem %s1, 66
  %76 = vst.msk [vmem:[%s75] ss:$8 sm:$0xf] %vm74, %v73
  %s77 = scalar_lea.vmem %s1, 66
  %78 = vst.msk [vmem:[%s77] ss:$8 sm:$0xf0] %vm74, %v73
  %s79 = scalar_lea.vmem %s0, 16
  %v80 = vld [vmem:[%s79] sm:$0xff]
  %81 = vrot.lane.b32.xlu0 %v80, 126
  %v82 = vpop.permute.xlu0 %81
  %vm83 = vcmask 7168
  %s84 = scalar_lea.vmem %s1, 130
  %85 = vst.msk [vmem:[%s84] ss:$8 sm:$0xf] %vm83, %v82
  %s86 = scalar_lea.vmem %s1, 130
  %87 = vst.msk [vmem:[%s86] ss:$8 sm:$0xf0] %vm83, %v82
  %s88 = scalar_lea.vmem %s0, 24
  %v89 = vld [vmem:[%s88] sm:$0xff]
  %90 = vrot.lane.b32.xlu0 %v89, 126
  %v91 = vpop.permute.xlu0 %90
  %vm92 = vcmask 7168
  %s93 = scalar_lea.vmem %s1, 194
  %94 = vst.msk [vmem:[%s93] ss:$8 sm:$0xf] %vm92, %v91
  %s95 = scalar_lea.vmem %s1, 194
  %96 = vst.msk [vmem:[%s95] ss:$8 sm:$0xf0] %vm92, %v91
  %v97 = vld [vmem:[%s0] sm:$0xff]
  %98 = vrot.lane.b32.xlu0 %v97, 125
  %v99 = vpop.permute.xlu0 %98
  %vm100 = vcmask 7168
  %s101 = scalar_lea.vmem %s1, 3
  %102 = vst.msk [vmem:[%s101] ss:$8 sm:$0xf] %vm100, %v99
  %s103 = scalar_lea.vmem %s1, 3
  %104 = vst.msk [vmem:[%s103] ss:$8 sm:$0xf0] %vm100, %v99
  %s105 = scalar_lea.vmem %s0, 8
  %v106 = vld [vmem:[%s105] sm:$0xff]
  %107 = vrot.lane.b32.xlu0 %v106, 125
  %v108 = vpop.permute.xlu0 %107
  %vm109 = vcmask 7168
  %s110 = scalar_lea.vmem %s1, 67
  %111 = vst.msk [vmem:[%s110] ss:$8 sm:$0xf] %vm109, %v108
  %s112 = scalar_lea.vmem %s1, 67
  %113 = vst.msk [vmem:[%s112] ss:$8 sm:$0xf0] %vm109, %v108
  %s114 = scalar_lea.vmem %s0, 16
  %v115 = vld [vmem:[%s114] sm:$0xff]
  %116 = vrot.lane.b32.xlu0 %v115, 125
  %v117 = vpop.permute.xlu0 %116
  %vm118 = vcmask 7168
  %s119 = scalar_lea.vmem %s1, 131
  %120 = vst.msk [vmem:[%s119] ss:$8 sm:$0xf] %vm118, %v117
  %s121 = scalar_lea.vmem %s1, 131
  %122 = vst.msk [vmem:[%s121] ss:$8 sm:$0xf0] %vm118, %v117
  %s123 = scalar_lea.vmem %s0, 24
  %v124 = vld [vmem:[%s123] sm:$0xff]
  %125 = vrot.lane.b32.xlu0 %v124, 125
  %v126 = vpop.permute.xlu0 %125
  %vm127 = vcmask 7168
  %s128 = scalar_lea.vmem %s1, 195
  %129 = vst.msk [vmem:[%s128] ss:$8 sm:$0xf] %vm127, %v126
  %s130 = scalar_lea.vmem %s1, 195
  %131 = vst.msk [vmem:[%s130] ss:$8 sm:$0xf0] %vm127, %v126
  %v132 = vld [vmem:[%s0] sm:$0xff]
  %133 = vrot.lane.b32.xlu0 %v132, 124
  %v134 = vpop.permute.xlu0 %133
  %vm135 = vcmask 7168
  %s136 = scalar_lea.vmem %s1, 4
  %137 = vst.msk [vmem:[%s136] ss:$8 sm:$0xf] %vm135, %v134
  %s138 = scalar_lea.vmem %s1, 4
  %139 = vst.msk [vmem:[%s138] ss:$8 sm:$0xf0] %vm135, %v134
  %s140 = scalar_lea.vmem %s0, 8
  %v141 = vld [vmem:[%s140] sm:$0xff]
  %142 = vrot.lane.b32.xlu0 %v141, 124
  %v143 = vpop.permute.xlu0 %142
  %vm144 = vcmask 7168
  %s145 = scalar_lea.vmem %s1, 68
  %146 = vst.msk [vmem:[%s145] ss:$8 sm:$0xf] %vm144, %v143
  %s147 = scalar_lea.vmem %s1, 68
  %148 = vst.msk [vmem:[%s147] ss:$8 sm:$0xf0] %vm144, %v143
  %s149 = scalar_lea.vmem %s0, 16
  %v150 = vld [vmem:[%s149] sm:$0xff]
  %151 = vrot.lane.b32.xlu0 %v150, 124
  %v152 = vpop.permute.xlu0 %151
  %vm153 = vcmask 7168
  %s154 = scalar_lea.vmem %s1, 132
  %155 = vst.msk [vmem:[%s154] ss:$8 sm:$0xf] %vm153, %v152
  %s156 = scalar_lea.vmem %s1, 132
  %157 = vst.msk [vmem:[%s156] ss:$8 sm:$0xf0] %vm153, %v152
  %s158 = scalar_lea.vmem %s0, 24
  %v159 = vld [vmem:[%s158] sm:$0xff]
  %160 = vrot.lane.b32.xlu0 %v159, 124
  %v161 = vpop.permute.xlu0 %160
  %vm162 = vcmask 7168
  %s163 = scalar_lea.vmem %s1, 196
  %164 = vst.msk [vmem:[%s163] ss:$8 sm:$0xf] %vm162, %v161
  %s165 = scalar_lea.vmem %s1, 196
  %166 = vst.msk [vmem:[%s165] ss:$8 sm:$0xf0] %vm162, %v161
  %v167 = vld [vmem:[%s0] sm:$0xff]
  %168 = vrot.lane.b32.xlu0 %v167, 123
  %v169 = vpop.permute.xlu0 %168
  %vm170 = vcmask 7168
  %s171 = scalar_lea.vmem %s1, 5
  %172 = vst.msk [vmem:[%s171] ss:$8 sm:$0xf] %vm170, %v169
  %s173 = scalar_lea.vmem %s1, 5
  %174 = vst.msk [vmem:[%s173] ss:$8 sm:$0xf0] %vm170, %v169
  %s175 = scalar_lea.vmem %s0, 8
  %v176 = vld [vmem:[%s175] sm:$0xff]
  %177 = vrot.lane.b32.xlu0 %v176, 123
  %v178 = vpop.permute.xlu0 %177
  %vm179 = vcmask 7168
  %s180 = scalar_lea.vmem %s1, 69
  %181 = vst.msk [vmem:[%s180] ss:$8 sm:$0xf] %vm179, %v178
  %s182 = scalar_lea.vmem %s1, 69
  %183 = vst.msk [vmem:[%s182] ss:$8 sm:$0xf0] %vm179, %v178
  %s184 = scalar_lea.vmem %s0, 16
  %v185 = vld [vmem:[%s184] sm:$0xff]
  %186 = vrot.lane.b32.xlu0 %v185, 123
  %v187 = vpop.permute.xlu0 %186
  %vm188 = vcmask 7168
  %s189 = scalar_lea.vmem %s1, 133
  %190 = vst.msk [vmem:[%s189] ss:$8 sm:$0xf] %vm188, %v187
  %s191 = scalar_lea.vmem %s1, 133
  %192 = vst.msk [vmem:[%s191] ss:$8 sm:$0xf0] %vm188, %v187
  %s193 = scalar_lea.vmem %s0, 24
  %v194 = vld [vmem:[%s193] sm:$0xff]
  %195 = vrot.lane.b32.xlu0 %v194, 123
  %v196 = vpop.permute.xlu0 %195
  %vm197 = vcmask 7168
  %s198 = scalar_lea.vmem %s1, 197
  %199 = vst.msk [vmem:[%s198] ss:$8 sm:$0xf] %vm197, %v196
  %s200 = scalar_lea.vmem %s1, 197
  %201 = vst.msk [vmem:[%s200] ss:$8 sm:$0xf0] %vm197, %v196
  %v202 = vld [vmem:[%s0] sm:$0xff]
  %203 = vrot.lane.b32.xlu0 %v202, 122
  %v204 = vpop.permute.xlu0 %203
  %vm205 = vcmask 7168
  %s206 = scalar_lea.vmem %s1, 6
  %207 = vst.msk [vmem:[%s206] ss:$8 sm:$0xf] %vm205, %v204
  %s208 = scalar_lea.vmem %s1, 6
  %209 = vst.msk [vmem:[%s208] ss:$8 sm:$0xf0] %vm205, %v204
  %s210 = scalar_lea.vmem %s0, 8
  %v211 = vld [vmem:[%s210] sm:$0xff]
  %212 = vrot.lane.b32.xlu0 %v211, 122
  %v213 = vpop.permute.xlu0 %212
  %vm214 = vcmask 7168
  %s215 = scalar_lea.vmem %s1, 70
  %216 = vst.msk [vmem:[%s215] ss:$8 sm:$0xf] %vm214, %v213
  %s217 = scalar_lea.vmem %s1, 70
  %218 = vst.msk [vmem:[%s217] ss:$8 sm:$0xf0] %vm214, %v213
  %s219 = scalar_lea.vmem %s0, 16
  %v220 = vld [vmem:[%s219] sm:$0xff]
  %221 = vrot.lane.b32.xlu0 %v220, 122
  %v222 = vpop.permute.xlu0 %221
  %vm223 = vcmask 7168
  %s224 = scalar_lea.vmem %s1, 134
  %225 = vst.msk [vmem:[%s224] ss:$8 sm:$0xf] %vm223, %v222
  %s226 = scalar_lea.vmem %s1, 134
  %227 = vst.msk [vmem:[%s226] ss:$8 sm:$0xf0] %vm223, %v222
  %s228 = scalar_lea.vmem %s0, 24
  %v229 = vld [vmem:[%s228] sm:$0xff]
  %230 = vrot.lane.b32.xlu0 %v229, 122
  %v231 = vpop.permute.xlu0 %230
  %vm232 = vcmask 7168
  %s233 = scalar_lea.vmem %s1, 198
  %234 = vst.msk [vmem:[%s233] ss:$8 sm:$0xf] %vm232, %v231
  %s235 = scalar_lea.vmem %s1, 198
  %236 = vst.msk [vmem:[%s235] ss:$8 sm:$0xf0] %vm232, %v231
  %v237 = vld [vmem:[%s0] sm:$0xff]
  %238 = vrot.lane.b32.xlu0 %v237, 121
  %v239 = vpop.permute.xlu0 %238
  %vm240 = vcmask 7168
  %s241 = scalar_lea.vmem %s1, 7
  %242 = vst.msk [vmem:[%s241] ss:$8 sm:$0xf] %vm240, %v239
  %s243 = scalar_lea.vmem %s1, 7
  %244 = vst.msk [vmem:[%s243] ss:$8 sm:$0xf0] %vm240, %v239
  %s245 = scalar_lea.vmem %s0, 8
  %v246 = vld [vmem:[%s245] sm:$0xff]
  %247 = vrot.lane.b32.xlu0 %v246, 121
  %v248 = vpop.permute.xlu0 %247
  %vm249 = vcmask 7168
  %s250 = scalar_lea.vmem %s1, 71
  %251 = vst.msk [vmem:[%s250] ss:$8 sm:$0xf] %vm249, %v248
  %s252 = scalar_lea.vmem %s1, 71
  %253 = vst.msk [vmem:[%s252] ss:$8 sm:$0xf0] %vm249, %v248
  %s254 = scalar_lea.vmem %s0, 16
  %v255 = vld [vmem:[%s254] sm:$0xff]
  %256 = vrot.lane.b32.xlu0 %v255, 121
  %v257 = vpop.permute.xlu0 %256
  %vm258 = vcmask 7168
  %s259 = scalar_lea.vmem %s1, 135
  %260 = vst.msk [vmem:[%s259] ss:$8 sm:$0xf] %vm258, %v257
  %s261 = scalar_lea.vmem %s1, 135
  %262 = vst.msk [vmem:[%s261] ss:$8 sm:$0xf0] %vm258, %v257
  %s263 = scalar_lea.vmem %s0, 24
  %v264 = vld [vmem:[%s263] sm:$0xff]
  %265 = vrot.lane.b32.xlu0 %v264, 121
  %v266 = vpop.permute.xlu0 %265
  %vm267 = vcmask 7168
  %s268 = scalar_lea.vmem %s1, 199
  %269 = vst.msk [vmem:[%s268] ss:$8 sm:$0xf] %vm267, %v266
  %s270 = scalar_lea.vmem %s1, 199
  %271 = vst.msk [vmem:[%s270] ss:$8 sm:$0xf0] %vm267, %v266

// kernel: tile.28
$region0: #{tile.28}
  #allocation0 [shape = 's32[1]{0}', space=sflag, size = 0x4, scoped, tag = 'scoped memory for tile.28']
  %s0 = inlined_call_operand.vmem [shape: f32[8], index: 0, kind: input, shape index: {}]
  %s1 = inlined_call_operand.vmem [shape: f32[16,8], index: 1, kind: output, shape index: {}]
  // Predicated region
  $region2: #{tile.28} parent=0 // pred_check
    _
  $region3: #{tile.28} parent=0 // pred_check_branch
    %3 = sbr.rel (0) target = $region5
  $region4: #{tile.28} parent=0 // pred_region
    _
  $region5: #{tile.28} parent=0 // pred_fallthru
    _
  %v4 = vld [vmem:[%s0] ss:$0 sm:$0xff]
  %5 = vst [vmem:[%s1] sm:$0xff] %v4
  %s6 = scalar_lea.vmem %s1, 8
  %7 = vst [vmem:[%s6] sm:$0xff] %v4

// kernel: tile.1
$region0: #{tile.1}
  %s0 = inlined_call_operand.vmem [shape: f32[16,8], index: 0, kind: input, shape index: {}]
  %s1 = inlined_call_operand.vmem [shape: f32[128,1], index: 1, kind: output, shape index: {}]
  %v2 = vld [vmem:[%s0] sm:$0xff]
  %vm3 = vcmask 7168
  %4 = vst.msk [vmem:[%s1] ss:$8 sm:$0xf] %vm3, %v2
  %5 = vst.msk [vmem:[%s1] ss:$8 sm:$0xf0] %vm3, %v2
  %s6 = scalar_lea.vmem %s0, 8
  %v7 = vld [vmem:[%s6] sm:$0xff]
  %vm8 = vcmask 7168
  %s9 = scalar_lea.vmem %s1, 64
  %10 = vst.msk [vmem:[%s9] ss:$8 sm:$0xf] %vm8, %v7
  %s11 = scalar_lea.vmem %s1, 64
  %12 = vst.msk [vmem:[%s11] ss:$8 sm:$0xf0] %vm8, %v7
  %v13 = vld [vmem:[%s0] sm:$0xff]
  %14 = vrot.lane.b32.xlu0 %v13, 127
  %v15 = vpop.permute.xlu0 %14
  %vm16 = vcmask 7168
  %s17 = scalar_lea.vmem %s1, 1
  %18 = vst.msk [vmem:[%s17] ss:$8 sm:$0xf] %vm16, %v15
  %s19 = scalar_lea.vmem %s1, 1
  %20 = vst.msk [vmem:[%s19] ss:$8 sm:$0xf0] %vm16, %v15
  %s21 = scalar_lea.vmem %s0, 8
  %v22 = vld [vmem:[%s21] sm:$0xff]
  %23 = vrot.lane.b32.xlu0 %v22, 127
  %v24 = vpop.permute.xlu0 %23
  %vm25 = vcmask 7168
  %s26 = scalar_lea.vmem %s1, 65
  %27 = vst.msk [vmem:[%s26] ss:$8 sm:$0xf] %vm25, %v24
  %s28 = scalar_lea.vmem %s1, 65
  %29 = vst.msk [vmem:[%s28] ss:$8 sm:$0xf0] %vm25, %v24
  %v30 = vld [vmem:[%s0] sm:$0xff]
  %31 = vrot.lane.b32.xlu0 %v30, 126
  %v32 = vpop.permute.xlu0 %31
  %vm33 = vcmask 7168
  %s34 = scalar_lea.vmem %s1, 2
  %35 = vst.msk [vmem:[%s34] ss:$8 sm:$0xf] %vm33, %v32
  %s36 = scalar_lea.vmem %s1, 2
  %37 = vst.msk [vmem:[%s36] ss:$8 sm:$0xf0] %vm33, %v32
  %s38 = scalar_lea.vmem %s0, 8
  %v39 = vld [vmem:[%s38] sm:$0xff]
  %40 = vrot.lane.b32.xlu0 %v39, 126
  %v41 = vpop.permute.xlu0 %40
  %vm42 = vcmask 7168
  %s43 = scalar_lea.vmem %s1, 66
  %44 = vst.msk [vmem:[%s43] ss:$8 sm:$0xf] %vm42, %v41
  %s45 = scalar_lea.vmem %s1, 66
  %46 = vst.msk [vmem:[%s45] ss:$8 sm:$0xf0] %vm42, %v41
  %v47 = vld [vmem:[%s0] sm:$0xff]
  %48 = vrot.lane.b32.xlu0 %v47, 125
  %v49 = vpop.permute.xlu0 %48
  %vm50 = vcmask 7168
  %s51 = scalar_lea.vmem %s1, 3
  %52 = vst.msk [vmem:[%s51] ss:$8 sm:$0xf] %vm50, %v49
  %s53 = scalar_lea.vmem %s1, 3
  %54 = vst.msk [vmem:[%s53] ss:$8 sm:$0xf0] %vm50, %v49
  %s55 = scalar_lea.vmem %s0, 8
  %v56 = vld [vmem:[%s55] sm:$0xff]
  %57 = vrot.lane.b32.xlu0 %v56, 125
  %v58 = vpop.permute.xlu0 %57
  %vm59 = vcmask 7168
  %s60 = scalar_lea.vmem %s1, 67
  %61 = vst.msk [vmem:[%s60] ss:$8 sm:$0xf] %vm59, %v58
  %s62 = scalar_lea.vmem %s1, 67
  %63 = vst.msk [vmem:[%s62] ss:$8 sm:$0xf0] %vm59, %v58
  %v64 = vld [vmem:[%s0] sm:$0xff]
  %65 = vrot.lane.b32.xlu0 %v64, 124
  %v66 = vpop.permute.xlu0 %65
  %vm67 = vcmask 7168
  %s68 = scalar_lea.vmem %s1, 4
  %69 = vst.msk [vmem:[%s68] ss:$8 sm:$0xf] %vm67, %v66
  %s70 = scalar_lea.vmem %s1, 4
  %71 = vst.msk [vmem:[%s70] ss:$8 sm:$0xf0] %vm67, %v66
  %s72 = scalar_lea.vmem %s0, 8
  %v73 = vld [vmem:[%s72] sm:$0xff]
  %74 = vrot.lane.b32.xlu0 %v73, 124
  %v75 = vpop.permute.xlu0 %74
  %vm76 = vcmask 7168
  %s77 = scalar_lea.vmem %s1, 68
  %78 = vst.msk [vmem:[%s77] ss:$8 sm:$0xf] %vm76, %v75
  %s79 = scalar_lea.vmem %s1, 68
  %80 = vst.msk [vmem:[%s79] ss:$8 sm:$0xf0] %vm76, %v75
  %v81 = vld [vmem:[%s0] sm:$0xff]
  %82 = vrot.lane.b32.xlu0 %v81, 123
  %v83 = vpop.permute.xlu0 %82
  %vm84 = vcmask 7168
  %s85 = scalar_lea.vmem %s1, 5
  %86 = vst.msk [vmem:[%s85] ss:$8 sm:$0xf] %vm84, %v83
  %s87 = scalar_lea.vmem %s1, 5
  %88 = vst.msk [vmem:[%s87] ss:$8 sm:$0xf0] %vm84, %v83
  %s89 = scalar_lea.vmem %s0, 8
  %v90 = vld [vmem:[%s89] sm:$0xff]
  %91 = vrot.lane.b32.xlu0 %v90, 123
  %v92 = vpop.permute.xlu0 %91
  %vm93 = vcmask 7168
  %s94 = scalar_lea.vmem %s1, 69
  %95 = vst.msk [vmem:[%s94] ss:$8 sm:$0xf] %vm93, %v92
  %s96 = scalar_lea.vmem %s1, 69
  %97 = vst.msk [vmem:[%s96] ss:$8 sm:$0xf0] %vm93, %v92
  %v98 = vld [vmem:[%s0] sm:$0xff]
  %99 = vrot.lane.b32.xlu0 %v98, 122
  %v100 = vpop.permute.xlu0 %99
  %vm101 = vcmask 7168
  %s102 = scalar_lea.vmem %s1, 6
  %103 = vst.msk [vmem:[%s102] ss:$8 sm:$0xf] %vm101, %v100
  %s104 = scalar_lea.vmem %s1, 6
  %105 = vst.msk [vmem:[%s104] ss:$8 sm:$0xf0] %vm101, %v100
  %s106 = scalar_lea.vmem %s0, 8
  %v107 = vld [vmem:[%s106] sm:$0xff]
  %108 = vrot.lane.b32.xlu0 %v107, 122
  %v109 = vpop.permute.xlu0 %108
  %vm110 = vcmask 7168
  %s111 = scalar_lea.vmem %s1, 70
  %112 = vst.msk [vmem:[%s111] ss:$8 sm:$0xf] %vm110, %v109
  %s113 = scalar_lea.vmem %s1, 70
  %114 = vst.msk [vmem:[%s113] ss:$8 sm:$0xf0] %vm110, %v109
  %v115 = vld [vmem:[%s0] sm:$0xff]
  %116 = vrot.lane.b32.xlu0 %v115, 121
  %v117 = vpop.permute.xlu0 %116
  %vm118 = vcmask 7168
  %s119 = scalar_lea.vmem %s1, 7
  %120 = vst.msk [vmem:[%s119] ss:$8 sm:$0xf] %vm118, %v117
  %s121 = scalar_lea.vmem %s1, 7
  %122 = vst.msk [vmem:[%s121] ss:$8 sm:$0xf0] %vm118, %v117
  %s123 = scalar_lea.vmem %s0, 8
  %v124 = vld [vmem:[%s123] sm:$0xff]
  %125 = vrot.lane.b32.xlu0 %v124, 121
  %v126 = vpop.permute.xlu0 %125
  %vm127 = vcmask 7168
  %s128 = scalar_lea.vmem %s1, 71
  %129 = vst.msk [vmem:[%s128] ss:$8 sm:$0xf] %vm127, %v126
  %s130 = scalar_lea.vmem %s1, 71
  %131 = vst.msk [vmem:[%s130] ss:$8 sm:$0xf0] %vm127, %v126

// kernel: tile.33
$region0: #{tile.33}
  #allocation0 [shape = 's32[1]{0}', space=sflag, size = 0x4, scoped, tag = 'scoped memory for tile.33']
  %s0 = inlined_call_operand.vmem [shape: f32[8], index: 0, kind: input, shape index: {}]
  %s1 = inlined_call_operand.vmem [shape: f32[8,8], index: 1, kind: output, shape index: {}]
  // Predicated region
  $region2: #{tile.33} parent=0 // pred_check
    _
  $region3: #{tile.33} parent=0 // pred_check_branch
    %3 = sbr.rel (0) target = $region5
  $region4: #{tile.33} parent=0 // pred_region
    _
  $region5: #{tile.33} parent=0 // pred_fallthru
    _
  %v4 = vld [vmem:[%s0] ss:$0 sm:$0xff]
  %5 = vst [vmem:[%s1] sm:$0xff] %v4

// kernel: tile.2
$region0: #{tile.2}
  %s0 = inlined_call_operand.vmem [shape: f32[8,8], index: 0, kind: input, shape index: {}]
  %s1 = inlined_call_operand.vmem [shape: f32[64,1], index: 1, kind: output, shape index: {}]
  %v2 = vld [vmem:[%s0] sm:$0xff]
  %vm3 = vcmask 7168
  %4 = vst.msk [vmem:[%s1] ss:$8 sm:$0xf] %vm3, %v2
  %5 = vst.msk [vmem:[%s1] ss:$8 sm:$0xf0] %vm3, %v2
  %v6 = vld [vmem:[%s0] sm:$0xff]
  %7 = vrot.lane.b32.xlu0 %v6, 127
  %v8 = vpop.permute.xlu0 %7
  %vm9 = vcmask 7168
  %s10 = scalar_lea.vmem %s1, 1
  %11 = vst.msk [vmem:[%s10] ss:$8 sm:$0xf] %vm9, %v8
  %s12 = scalar_lea.vmem %s1, 1
  %13 = vst.msk [vmem:[%s12] ss:$8 sm:$0xf0] %vm9, %v8
  %v14 = vld [vmem:[%s0] sm:$0xff]
  %15 = vrot.lane.b32.xlu0 %v14, 126
  %v16 = vpop.permute.xlu0 %15
  %vm17 = vcmask 7168
  %s18 = scalar_lea.vmem %s1, 2
  %19 = vst.msk [vmem:[%s18] ss:$8 sm:$0xf] %vm17, %v16
  %s20 = scalar_lea.vmem %s1, 2
  %21 = vst.msk [vmem:[%s20] ss:$8 sm:$0xf0] %vm17, %v16
  %v22 = vld [vmem:[%s0] sm:$0xff]
  %23 = vrot.lane.b32.xlu0 %v22, 125
  %v24 = vpop.permute.xlu0 %23
  %vm25 = vcmask 7168
  %s26 = scalar_lea.vmem %s1, 3
  %27 = vst.msk [vmem:[%s26] ss:$8 sm:$0xf] %vm25, %v24
  %s28 = scalar_lea.vmem %s1, 3
  %29 = vst.msk [vmem:[%s28] ss:$8 sm:$0xf0] %vm25, %v24
  %v30 = vld [vmem:[%s0] sm:$0xff]
  %31 = vrot.lane.b32.xlu0 %v30, 124
  %v32 = vpop.permute.xlu0 %31
  %vm33 = vcmask 7168
  %s34 = scalar_lea.vmem %s1, 4
  %35 = vst.msk [vmem:[%s34] ss:$8 sm:$0xf] %vm33, %v32
  %s36 = scalar_lea.vmem %s1, 4
  %37 = vst.msk [vmem:[%s36] ss:$8 sm:$0xf0] %vm33, %v32
  %v38 = vld [vmem:[%s0] sm:$0xff]
  %39 = vrot.lane.b32.xlu0 %v38, 123
  %v40 = vpop.permute.xlu0 %39
  %vm41 = vcmask 7168
  %s42 = scalar_lea.vmem %s1, 5
  %43 = vst.msk [vmem:[%s42] ss:$8 sm:$0xf] %vm41, %v40
  %s44 = scalar_lea.vmem %s1, 5
  %45 = vst.msk [vmem:[%s44] ss:$8 sm:$0xf0] %vm41, %v40
  %v46 = vld [vmem:[%s0] sm:$0xff]
  %47 = vrot.lane.b32.xlu0 %v46, 122
  %v48 = vpop.permute.xlu0 %47
  %vm49 = vcmask 7168
  %s50 = scalar_lea.vmem %s1, 6
  %51 = vst.msk [vmem:[%s50] ss:$8 sm:$0xf] %vm49, %v48
  %s52 = scalar_lea.vmem %s1, 6
  %53 = vst.msk [vmem:[%s52] ss:$8 sm:$0xf0] %vm49, %v48
  %v54 = vld [vmem:[%s0] sm:$0xff]
  %55 = vrot.lane.b32.xlu0 %v54, 121
  %v56 = vpop.permute.xlu0 %55
  %vm57 = vcmask 7168
  %s58 = scalar_lea.vmem %s1, 7
  %59 = vst.msk [vmem:[%s58] ss:$8 sm:$0xf] %vm57, %v56
  %s60 = scalar_lea.vmem %s1, 7
  %61 = vst.msk [vmem:[%s60] ss:$8 sm:$0xf0] %vm57, %v56

// kernel: tile.38
$region0: #{tile.38}
  #allocation0 [shape = 's32[1]{0}', space=sflag, size = 0x4, scoped, tag = 'scoped memory for tile.38']
  %s0 = inlined_call_operand.vmem [shape: f32[8], index: 0, kind: input, shape index: {}]
  %s1 = inlined_call_operand.vmem [shape: f32[4,8], index: 1, kind: output, shape index: {}]
  // Predicated region
  $region2: #{tile.38} parent=0 // pred_check
    _
  $region3: #{tile.38} parent=0 // pred_check_branch
    %3 = sbr.rel (0) target = $region5
  $region4: #{tile.38} parent=0 // pred_region
    _
  $region5: #{tile.38} parent=0 // pred_fallthru
    _
  %v4 = vld [vmem:[%s0] ss:$0 sm:$0xff]
  %5 = vst [vmem:[%s1] sm:$0xf] %v4

// kernel: tile.3
$region0: #{tile.3}
  %s0 = inlined_call_operand.vmem [shape: f32[4,8], index: 0, kind: input, shape index: {}]
  %s1 = inlined_call_operand.vmem [shape: f32[32,1], index: 1, kind: output, shape index: {}]
  $region1: #{tile.3} parent=0
    #allocation0 [shape = 'u8[4096]{0}', space=vmem, size = 0x1000, scoped, tag = 'scoped mem for input reshape']
    %s3 = sshllo.u32 0, 4
    %v4 = vld [vmem:[%s0] sm:%s3]
    %5 = vst [vmem:[#allocation0] sm:%s3] %v4
    %v6 = vld [vmem:[#allocation0] sm:$0xf]
    %vm7 = vcmask 7168
    %8 = vst.msk [vmem:[%s1] ss:$8 sm:$0xf] %vm7, %v6
    %v9 = vld [vmem:[#allocation0] sm:$0xf]
    %10 = vrot.lane.b32.xlu0 %v9, 127
    %v11 = vpop.permute.xlu0 %10
    %vm12 = vcmask 7168
    %s13 = scalar_lea.vmem %s1, 1
    %14 = vst.msk [vmem:[%s13] ss:$8 sm:$0xf] %vm12, %v11
    %v15 = vld [vmem:[#allocation0] sm:$0xf]
    %16 = vrot.lane.b32.xlu0 %v15, 126
    %v17 = vpop.permute.xlu0 %16
    %vm18 = vcmask 7168
    %s19 = scalar_lea.vmem %s1, 2
    %20 = vst.msk [vmem:[%s19] ss:$8 sm:$0xf] %vm18, %v17
    %v21 = vld [vmem:[#allocation0] sm:$0xf]
    %22 = vrot.lane.b32.xlu0 %v21, 125
    %v23 = vpop.permute.xlu0 %22
    %vm24 = vcmask 7168
    %s25 = scalar_lea.vmem %s1, 3
    %26 = vst.msk [vmem:[%s25] ss:$8 sm:$0xf] %vm24, %v23
    %v27 = vld [vmem:[#allocation0] sm:$0xf]
    %28 = vrot.lane.b32.xlu0 %v27, 124
    %v29 = vpop.permute.xlu0 %28
    %vm30 = vcmask 7168
    %s31 = scalar_lea.vmem %s1, 4
    %32 = vst.msk [vmem:[%s31] ss:$8 sm:$0xf] %vm30, %v29
    %v33 = vld [vmem:[#allocation0] sm:$0xf]
    %34 = vrot.lane.b32.xlu0 %v33, 123
    %v35 = vpop.permute.xlu0 %34
    %vm36 = vcmask 7168
    %s37 = scalar_lea.vmem %s1, 5
    %38 = vst.msk [vmem:[%s37] ss:$8 sm:$0xf] %vm36, %v35
    %v39 = vld [vmem:[#allocation0] sm:$0xf]
    %40 = vrot.lane.b32.xlu0 %v39, 122
    %v41 = vpop.permute.xlu0 %40
    %vm42 = vcmask 7168
    %s43 = scalar_lea.vmem %s1, 6
    %44 = vst.msk [vmem:[%s43] ss:$8 sm:$0xf] %vm42, %v41
    %v45 = vld [vmem:[#allocation0] sm:$0xf]
    %46 = vrot.lane.b32.xlu0 %v45, 121
    %v47 = vpop.permute.xlu0 %46
    %vm48 = vcmask 7168
    %s49 = scalar_lea.vmem %s1, 7
    %50 = vst.msk [vmem:[%s49] ss:$8 sm:$0xf] %vm48, %v47

// kernel: cnn1d_forward.1
$region0: #{cnn1d_forward.1}
  #allocation0 [shape = 'u32[]', space=smem, size = 0x4, offset = 0x4, fixed_abs, tag = 'smem constant byte address 0x4 - core index']
  #allocation1 [shape = 'u32[144,128]{1,0:T(1,128)}', space=vmem, size = 0x12000, scoped, tag = 'internal scratch']
  %s0 = inlined_call_operand.vmem [shape: f32[512,2], index: 0, kind: input, shape index: {}]
  %s1 = inlined_call_operand.vmem [shape: f32[256,512], index: 1, kind: input, shape index: {}]
  %s2 = inlined_call_operand.vmem [shape: f32[256,1], index: 2, kind: input, shape index: {}]
  %s3 = inlined_call_operand.vmem [shape: f32[128,256], index: 3, kind: input, shape index: {}]
  %s4 = inlined_call_operand.vmem [shape: f32[128,1], index: 4, kind: input, shape index: {}]
  %s5 = inlined_call_operand.vmem [shape: f32[64,128], index: 5, kind: input, shape index: {}]
  %s6 = inlined_call_operand.vmem [shape: f32[64,1], index: 6, kind: input, shape index: {}]
  %s7 = inlined_call_operand.vmem [shape: f32[32,64], index: 7, kind: input, shape index: {}]
  %s8 = inlined_call_operand.vmem [shape: f32[32,1], index: 8, kind: input, shape index: {}]
  %s9 = inlined_call_operand.vmem [shape: f32[128,32], index: 9, kind: input, shape index: {}]
  %s10 = inlined_call_operand.vmem [shape: f32[128,1], index: 10, kind: input, shape index: {}]
  %s11 = inlined_call_operand.vmem [shape: f32[128,128], index: 11, kind: input, shape index: {}]
  %s12 = inlined_call_operand.vmem [shape: f32[1,128], index: 12, kind: input, shape index: {}]
  %s13 = inlined_call_operand.hbm [shape: f32[2,128], index: 13, kind: output, shape index: {}]
  %s14 = sld [smem:[#allocation0]]
  $region62: #{cnn1d_forward.1} parent=0
    _
  %s16 = ssub.s32 1, %s14
  %s17 = scalar_select 0, %s16, %s14
  $region1: #{cnn1d_forward.1} parent=0
    #allocation2 [shape = 'u8[1024]{0}', space=vmem, size = 0x400, scoped, tag = 'output window, operand 0, single buffered']
    #allocation3 [shape = 's32[1]{0}', space=sflag, size = 0x4, scoped, tag = 'scoped memory for cnn1d_forward.1']
    %18 = vsyncpa [#allocation3], 0
    // Predicated region
    $region2: #{cnn1d_forward.1} parent=1 // pred_check
      _
    $region3: #{cnn1d_forward.1} parent=1 // pred_check_branch
      %20 = sbr.rel (0) target = $region5
    $region4: #{cnn1d_forward.1} parent=1 // pred_region
      _
    $region5: #{cnn1d_forward.1} parent=1 // pred_fallthru
      _
    // Predicated region
    $region6: #{cnn1d_forward.1} parent=1 // pred_check
      _
    $region7: #{cnn1d_forward.1} parent=1 // pred_check_branch
      %22 = sbr.rel (0) target = $region9
    $region8: #{cnn1d_forward.1} parent=1 // pred_region
      _
    $region9: #{cnn1d_forward.1} parent=1 // pred_fallthru
      _
    // Predicated region
    $region10: #{cnn1d_forward.1} parent=1 // pred_check
      _
    $region11: #{cnn1d_forward.1} parent=1 // pred_check_branch
      %24 = sbr.rel (0) target = $region13
    $region12: #{cnn1d_forward.1} parent=1 // pred_region
      _
    $region13: #{cnn1d_forward.1} parent=1 // pred_fallthru
      _
    // Predicated region
    $region14: #{cnn1d_forward.1} parent=1 // pred_check
      _
    $region15: #{cnn1d_forward.1} parent=1 // pred_check_branch
      %26 = sbr.rel (0) target = $region17
    $region16: #{cnn1d_forward.1} parent=1 // pred_region
      _
    $region17: #{cnn1d_forward.1} parent=1 // pred_fallthru
      _
    // Predicated region
    $region18: #{cnn1d_forward.1} parent=1 // pred_check
      _
    $region19: #{cnn1d_forward.1} parent=1 // pred_check_branch
      %28 = sbr.rel (0) target = $region21
    $region20: #{cnn1d_forward.1} parent=1 // pred_region
      _
    $region21: #{cnn1d_forward.1} parent=1 // pred_fallthru
      _
    // Predicated region
    $region22: #{cnn1d_forward.1} parent=1 // pred_check
      _
    $region23: #{cnn1d_forward.1} parent=1 // pred_check_branch
      %30 = sbr.rel (0) target = $region25
    $region24: #{cnn1d_forward.1} parent=1 // pred_region
      _
    $region25: #{cnn1d_forward.1} parent=1 // pred_fallthru
      _
    // Predicated region
    $region26: #{cnn1d_forward.1} parent=1 // pred_check
      _
    $region27: #{cnn1d_forward.1} parent=1 // pred_check_branch
      %32 = sbr.rel (0) target = $region29
    $region28: #{cnn1d_forward.1} parent=1 // pred_region
      _
    $region29: #{cnn1d_forward.1} parent=1 // pred_fallthru
      _
    // Predicated region
    $region30: #{cnn1d_forward.1} parent=1 // pred_check
      _
    $region31: #{cnn1d_forward.1} parent=1 // pred_check_branch
      %34 = sbr.rel (0) target = $region33
    $region32: #{cnn1d_forward.1} parent=1 // pred_region
      _
    $region33: #{cnn1d_forward.1} parent=1 // pred_fallthru
      _
    // Predicated region
    $region34: #{cnn1d_forward.1} parent=1 // pred_check
      _
    $region35: #{cnn1d_forward.1} parent=1 // pred_check_branch
      %36 = sbr.rel (0) target = $region37
    $region36: #{cnn1d_forward.1} parent=1 // pred_region
      _
    $region37: #{cnn1d_forward.1} parent=1 // pred_fallthru
      _
    // Predicated region
    $region38: #{cnn1d_forward.1} parent=1 // pred_check
      _
    $region39: #{cnn1d_forward.1} parent=1 // pred_check_branch
      %38 = sbr.rel (0) target = $region41
    $region40: #{cnn1d_forward.1} parent=1 // pred_region
      _
    $region41: #{cnn1d_forward.1} parent=1 // pred_fallthru
      _
    // Predicated region
    $region42: #{cnn1d_forward.1} parent=1 // pred_check
      _
    $region43: #{cnn1d_forward.1} parent=1 // pred_check_branch
      %40 = sbr.rel (0) target = $region45
    $region44: #{cnn1d_forward.1} parent=1 // pred_region
      _
    $region45: #{cnn1d_forward.1} parent=1 // pred_fallthru
      _
    // Predicated region
    $region46: #{cnn1d_forward.1} parent=1 // pred_check
      _
    $region47: #{cnn1d_forward.1} parent=1 // pred_check_branch
      %42 = sbr.rel (0) target = $region49
    $region48: #{cnn1d_forward.1} parent=1 // pred_region
      _
    $region49: #{cnn1d_forward.1} parent=1 // pred_fallthru
      _
    // Predicated region
    $region50: #{cnn1d_forward.1} parent=1 // pred_check
      _
    $region51: #{cnn1d_forward.1} parent=1 // pred_check_branch
      %44 = sbr.rel (0) target = $region53
    $region52: #{cnn1d_forward.1} parent=1 // pred_region
      _
    $region53: #{cnn1d_forward.1} parent=1 // pred_fallthru
      _
    %v45 = vld [vmem:[%s0] sm:$0xff]
    %v46 = vld [vmem:[%s0 + $0x8] sm:$0xff]
    %v47 = vld [vmem:[%s0 + $0x10] sm:$0xff]
    %v48 = vld [vmem:[%s0 + $0x18] sm:$0xff]
    %v49 = vld [vmem:[%s0 + $0x20] sm:$0xff]
    %v50 = vld [vmem:[%s0 + $0x28] sm:$0xff]
    %v51 = vld [vmem:[%s0 + $0x30] sm:$0xff]
    %v52 = vld [vmem:[%s0 + $0x38] sm:$0xff]
    %v53 = vld [vmem:[%s0 + $0x40] sm:$0xff]
    %v54 = vld [vmem:[%s0 + $0x48] sm:$0xff]
    %v55 = vld [vmem:[%s0 + $0x50] sm:$0xff]
    %v56 = vld [vmem:[%s0 + $0x58] sm:$0xff]
    %v57 = vld [vmem:[%s0 + $0x60] sm:$0xff]
    %v58 = vld [vmem:[%s0 + $0x68] sm:$0xff]
    %v59 = vld [vmem:[%s0 + $0x70] sm:$0xff]
    %v60 = vld [vmem:[%s0 + $0x78] sm:$0xff]
    %v61 = vld [vmem:[%s0 + $0x80] sm:$0xff]
    %v62 = vld [vmem:[%s0 + $0x88] sm:$0xff]
    %v63 = vld [vmem:[%s0 + $0x90] sm:$0xff]
    %v64 = vld [vmem:[%s0 + $0x98] sm:$0xff]
    %v65 = vld [vmem:[%s0 + $0xa0] sm:$0xff]
    %v66 = vld [vmem:[%s0 + $0xa8] sm:$0xff]
    %v67 = vld [vmem:[%s0 + $0xb0] sm:$0xff]
    %v68 = vld [vmem:[%s0 + $0xb8] sm:$0xff]
    %v69 = vld [vmem:[%s0 + $0xc0] sm:$0xff]
    %v70 = vld [vmem:[%s0 + $0xc8] sm:$0xff]
    %v71 = vld [vmem:[%s0 + $0xd0] sm:$0xff]
    %v72 = vld [vmem:[%s0 + $0xd8] sm:$0xff]
    %v73 = vld [vmem:[%s0 + $0xe0] sm:$0xff]
    %v74 = vld [vmem:[%s0 + $0xe8] sm:$0xff]
    %v75 = vld [vmem:[%s0 + $0xf0] sm:$0xff]
    %v76 = vld [vmem:[%s0 + $0xf8] sm:$0xff]
    %v77 = vld [vmem:[%s0 + $0x100] sm:$0xff]
    %v78 = vld [vmem:[%s0 + $0x108] sm:$0xff]
    %v79 = vld [vmem:[%s0 + $0x110] sm:$0xff]
    %v80 = vld [vmem:[%s0 + $0x118] sm:$0xff]
    %v81 = vld [vmem:[%s0 + $0x120] sm:$0xff]
    %v82 = vld [vmem:[%s0 + $0x128] sm:$0xff]
    %v83 = vld [vmem:[%s0 + $0x130] sm:$0xff]
    %v84 = vld [vmem:[%s0 + $0x138] sm:$0xff]
    %v85 = vld [vmem:[%s0 + $0x140] sm:$0xff]
    %v86 = vld [vmem:[%s0 + $0x148] sm:$0xff]
    %v87 = vld [vmem:[%s0 + $0x150] sm:$0xff]
    %v88 = vld [vmem:[%s0 + $0x158] sm:$0xff]
    %v89 = vld [vmem:[%s0 + $0x160] sm:$0xff]
    %v90 = vld [vmem:[%s0 + $0x168] sm:$0xff]
    %v91 = vld [vmem:[%s0 + $0x170] sm:$0xff]
    %v92 = vld [vmem:[%s0 + $0x178] sm:$0xff]
    %v93 = vld [vmem:[%s0 + $0x180] sm:$0xff]
    %v94 = vld [vmem:[%s0 + $0x188] sm:$0xff]
    %v95 = vld [vmem:[%s0 + $0x190] sm:$0xff]
    %v96 = vld [vmem:[%s0 + $0x198] sm:$0xff]
    %v97 = vld [vmem:[%s0 + $0x1a0] sm:$0xff]
    %v98 = vld [vmem:[%s0 + $0x1a8] sm:$0xff]
    %v99 = vld [vmem:[%s0 + $0x1b0] sm:$0xff]
    %v100 = vld [vmem:[%s0 + $0x1b8] sm:$0xff]
    %v101 = vld [vmem:[%s0 + $0x1c0] sm:$0xff]
    %v102 = vld [vmem:[%s0 + $0x1c8] sm:$0xff]
    %v103 = vld [vmem:[%s0 + $0x1d0] sm:$0xff]
    %v104 = vld [vmem:[%s0 + $0x1d8] sm:$0xff]
    %v105 = vld [vmem:[%s0 + $0x1e0] sm:$0xff]
    %v106 = vld [vmem:[%s0 + $0x1e8] sm:$0xff]
    %v107 = vld [vmem:[%s0 + $0x1f0] sm:$0xff]
    %v108 = vld [vmem:[%s0 + $0x1f8] sm:$0xff]
    %v109 = vld [vmem:[%s1] sm:$0xff]
    %v110 = vld [vmem:[%s1 + $0x8] sm:$0xff]
    %v111 = vld [vmem:[%s1 + $0x10] sm:$0xff]
    %v112 = vld [vmem:[%s1 + $0x18] sm:$0xff]
    %v113 = vld [vmem:[%s1 + $0x20] sm:$0xff]
    %v114 = vld [vmem:[%s1 + $0x28] sm:$0xff]
    %v115 = vld [vmem:[%s1 + $0x30] sm:$0xff]
    %v116 = vld [vmem:[%s1 + $0x38] sm:$0xff]
    %v117 = vld [vmem:[%s1 + $0x40] sm:$0xff]
    %v118 = vld [vmem:[%s1 + $0x48] sm:$0xff]
    %v119 = vld [vmem:[%s1 + $0x50] sm:$0xff]
    %v120 = vld [vmem:[%s1 + $0x58] sm:$0xff]
    %v121 = vld [vmem:[%s1 + $0x60] sm:$0xff]
    %v122 = vld [vmem:[%s1 + $0x68] sm:$0xff]
    %v123 = vld [vmem:[%s1 + $0x70] sm:$0xff]
    %v124 = vld [vmem:[%s1 + $0x78] sm:$0xff]
    %v125 = vld [vmem:[%s1 + $0x80] sm:$0xff]
    %v126 = vld [vmem:[%s1 + $0x88] sm:$0xff]
    %v127 = vld [vmem:[%s1 + $0x90] sm:$0xff]
    %v128 = vld [vmem:[%s1 + $0x98] sm:$0xff]
    %v129 = vld [vmem:[%s1 + $0xa0] sm:$0xff]
    %v130 = vld [vmem:[%s1 + $0xa8] sm:$0xff]
    %v131 = vld [vmem:[%s1 + $0xb0] sm:$0xff]
    %v132 = vld [vmem:[%s1 + $0xb8] sm:$0xff]
    %v133 = vld [vmem:[%s1 + $0xc0] sm:$0xff]
    %v134 = vld [vmem:[%s1 + $0xc8] sm:$0xff]
    %v135 = vld [vmem:[%s1 + $0xd0] sm:$0xff]
    %v136 = vld [vmem:[%s1 + $0xd8] sm:$0xff]
    %v137 = vld [vmem:[%s1 + $0xe0] sm:$0xff]
    %v138 = vld [vmem:[%s1 + $0xe8] sm:$0xff]
    %v139 = vld [vmem:[%s1 + $0xf0] sm:$0xff]
    %v140 = vld [vmem:[%s1 + $0xf8] sm:$0xff]
    %v141 = vld [vmem:[%s1 + $0x100] sm:$0xff]
    %v142 = vld [vmem:[%s1 + $0x108] sm:$0xff]
    %v143 = vld [vmem:[%s1 + $0x110] sm:$0xff]
    %v144 = vld [vmem:[%s1 + $0x118] sm:$0xff]
    %v145 = vld [vmem:[%s1 + $0x120] sm:$0xff]
    %v146 = vld [vmem:[%s1 + $0x128] sm:$0xff]
    %v147 = vld [vmem:[%s1 + $0x130] sm:$0xff]
    %v148 = vld [vmem:[%s1 + $0x138] sm:$0xff]
    %v149 = vld [vmem:[%s1 + $0x140] sm:$0xff]
    %v150 = vld [vmem:[%s1 + $0x148] sm:$0xff]
    %v151 = vld [vmem:[%s1 + $0x150] sm:$0xff]
    %v152 = vld [vmem:[%s1 + $0x158] sm:$0xff]
    %v153 = vld [vmem:[%s1 + $0x160] sm:$0xff]
    %v154 = vld [vmem:[%s1 + $0x168] sm:$0xff]
    %v155 = vld [vmem:[%s1 + $0x170] sm:$0xff]
    %v156 = vld [vmem:[%s1 + $0x178] sm:$0xff]
    %v157 = vld [vmem:[%s1 + $0x180] sm:$0xff]
    %v158 = vld [vmem:[%s1 + $0x188] sm:$0xff]
    %v159 = vld [vmem:[%s1 + $0x190] sm:$0xff]
    %v160 = vld [vmem:[%s1 + $0x198] sm:$0xff]
    %v161 = vld [vmem:[%s1 + $0x1a0] sm:$0xff]
    %v162 = vld [vmem:[%s1 + $0x1a8] sm:$0xff]
    %v163 = vld [vmem:[%s1 + $0x1b0] sm:$0xff]
    %v164 = vld [vmem:[%s1 + $0x1b8] sm:$0xff]
    %v165 = vld [vmem:[%s1 + $0x1c0] sm:$0xff]
    %v166 = vld [vmem:[%s1 + $0x1c8] sm:$0xff]
    %v167 = vld [vmem:[%s1 + $0x1d0] sm:$0xff]
    %v168 = vld [vmem:[%s1 + $0x1d8] sm:$0xff]
    %v169 = vld [vmem:[%s1 + $0x1e0] sm:$0xff]
    %v170 = vld [vmem:[%s1 + $0x1e8] sm:$0xff]
    %v171 = vld [vmem:[%s1 + $0x1f0] sm:$0xff]
    %v172 = vld [vmem:[%s1 + $0x1f8] sm:$0xff]
    %v173 = vld [vmem:[%s1 + $0x200] sm:$0xff]
    %v174 = vld [vmem:[%s1 + $0x208] sm:$0xff]
    %v175 = vld [vmem:[%s1 + $0x210] sm:$0xff]
    %v176 = vld [vmem:[%s1 + $0x218] sm:$0xff]
    %v177 = vld [vmem:[%s1 + $0x220] sm:$0xff]
    %v178 = vld [vmem:[%s1 + $0x228] sm:$0xff]
    %v179 = vld [vmem:[%s1 + $0x230] sm:$0xff]
    %v180 = vld [vmem:[%s1 + $0x238] sm:$0xff]
    %v181 = vld [vmem:[%s1 + $0x240] sm:$0xff]
    %v182 = vld [vmem:[%s1 + $0x248] sm:$0xff]
    %v183 = vld [vmem:[%s1 + $0x250] sm:$0xff]
    %v184 = vld [vmem:[%s1 + $0x258] sm:$0xff]
    %v185 = vld [vmem:[%s1 + $0x260] sm:$0xff]
    %v186 = vld [vmem:[%s1 + $0x268] sm:$0xff]
    %v187 = vld [vmem:[%s1 + $0x270] sm:$0xff]
    %v188 = vld [vmem:[%s1 + $0x278] sm:$0xff]
    %v189 = vld [vmem:[%s1 + $0x280] sm:$0xff]
    %v190 = vld [vmem:[%s1 + $0x288] sm:$0xff]
    %v191 = vld [vmem:[%s1 + $0x290] sm:$0xff]
    %v192 = vld [vmem:[%s1 + $0x298] sm:$0xff]
    %v193 = vld [vmem:[%s1 + $0x2a0] sm:$0xff]
    %v194 = vld [vmem:[%s1 + $0x2a8] sm:$0xff]
    %v195 = vld [vmem:[%s1 + $0x2b0] sm:$0xff]
    %v196 = vld [vmem:[%s1 + $0x2b8] sm:$0xff]
    %v197 = vld [vmem:[%s1 + $0x2c0] sm:$0xff]
    %v198 = vld [vmem:[%s1 + $0x2c8] sm:$0xff]
    %v199 = vld [vmem:[%s1 + $0x2d0] sm:$0xff]
    %v200 = vld [vmem:[%s1 + $0x2d8] sm:$0xff]
    %v201 = vld [vmem:[%s1 + $0x2e0] sm:$0xff]
    %v202 = vld [vmem:[%s1 + $0x2e8] sm:$0xff]
    %v203 = vld [vmem:[%s1 + $0x2f0] sm:$0xff]
    %v204 = vld [vmem:[%s1 + $0x2f8] sm:$0xff]
    %v205 = vld [vmem:[%s1 + $0x300] sm:$0xff]
    %v206 = vld [vmem:[%s1 + $0x308] sm:$0xff]
    %v207 = vld [vmem:[%s1 + $0x310] sm:$0xff]
    %v208 = vld [vmem:[%s1 + $0x318] sm:$0xff]
    %v209 = vld [vmem:[%s1 + $0x320] sm:$0xff]
    %v210 = vld [vmem:[%s1 + $0x328] sm:$0xff]
    %v211 = vld [vmem:[%s1 + $0x330] sm:$0xff]
    %v212 = vld [vmem:[%s1 + $0x338] sm:$0xff]
    %v213 = vld [vmem:[%s1 + $0x340] sm:$0xff]
    %v214 = vld [vmem:[%s1 + $0x348] sm:$0xff]
    %v215 = vld [vmem:[%s1 + $0x350] sm:$0xff]
    %v216 = vld [vmem:[%s1 + $0x358] sm:$0xff]
    %v217 = vld [vmem:[%s1 + $0x360] sm:$0xff]
    %v218 = vld [vmem:[%s1 + $0x368] sm:$0xff]
    %v219 = vld [vmem:[%s1 + $0x370] sm:$0xff]
    %v220 = vld [vmem:[%s1 + $0x378] sm:$0xff]
    %v221 = vld [vmem:[%s1 + $0x380] sm:$0xff]
    %v222 = vld [vmem:[%s1 + $0x388] sm:$0xff]
    %v223 = vld [vmem:[%s1 + $0x390] sm:$0xff]
    %v224 = vld [vmem:[%s1 + $0x398] sm:$0xff]
    %v225 = vld [vmem:[%s1 + $0x3a0] sm:$0xff]
    %v226 = vld [vmem:[%s1 + $0x3a8] sm:$0xff]
    %v227 = vld [vmem:[%s1 + $0x3b0] sm:$0xff]
    %v228 = vld [vmem:[%s1 + $0x3b8] sm:$0xff]
    %v229 = vld [vmem:[%s1 + $0x3c0] sm:$0xff]
    %v230 = vld [vmem:[%s1 + $0x3c8] sm:$0xff]
    %v231 = vld [vmem:[%s1 + $0x3d0] sm:$0xff]
    %v232 = vld [vmem:[%s1 + $0x3d8] sm:$0xff]
    %v233 = vld [vmem:[%s1 + $0x3e0] sm:$0xff]
    %v234 = vld [vmem:[%s1 + $0x3e8] sm:$0xff]
    %v235 = vld [vmem:[%s1 + $0x3f0] sm:$0xff]
    %v236 = vld [vmem:[%s1 + $0x3f8] sm:$0xff]
    %v237 = vld [vmem:[%s2] sm:$0xff]
    %v238 = vld [vmem:[%s2 + $0x8] sm:$0xff]
    %v239 = vld [vmem:[%s2 + $0x10] sm:$0xff]
    %v240 = vld [vmem:[%s2 + $0x18] sm:$0xff]
    %v241 = vld [vmem:[%s2 + $0x20] sm:$0xff]
    %v242 = vld [vmem:[%s2 + $0x28] sm:$0xff]
    %v243 = vld [vmem:[%s2 + $0x30] sm:$0xff]
    %v244 = vld [vmem:[%s2 + $0x38] sm:$0xff]
    %v245 = vld [vmem:[%s2 + $0x40] sm:$0xff]
    %v246 = vld [vmem:[%s2 + $0x48] sm:$0xff]
    %v247 = vld [vmem:[%s2 + $0x50] sm:$0xff]
    %v248 = vld [vmem:[%s2 + $0x58] sm:$0xff]
    %v249 = vld [vmem:[%s2 + $0x60] sm:$0xff]
    %v250 = vld [vmem:[%s2 + $0x68] sm:$0xff]
    %v251 = vld [vmem:[%s2 + $0x70] sm:$0xff]
    %v252 = vld [vmem:[%s2 + $0x78] sm:$0xff]
    %v253 = vld [vmem:[%s2 + $0x80] sm:$0xff]
    %v254 = vld [vmem:[%s2 + $0x88] sm:$0xff]
    %v255 = vld [vmem:[%s2 + $0x90] sm:$0xff]
    %v256 = vld [vmem:[%s2 + $0x98] sm:$0xff]
    %v257 = vld [vmem:[%s2 + $0xa0] sm:$0xff]
    %v258 = vld [vmem:[%s2 + $0xa8] sm:$0xff]
    %v259 = vld [vmem:[%s2 + $0xb0] sm:$0xff]
    %v260 = vld [vmem:[%s2 + $0xb8] sm:$0xff]
    %v261 = vld [vmem:[%s2 + $0xc0] sm:$0xff]
    %v262 = vld [vmem:[%s2 + $0xc8] sm:$0xff]
    %v263 = vld [vmem:[%s2 + $0xd0] sm:$0xff]
    %v264 = vld [vmem:[%s2 + $0xd8] sm:$0xff]
    %v265 = vld [vmem:[%s2 + $0xe0] sm:$0xff]
    %v266 = vld [vmem:[%s2 + $0xe8] sm:$0xff]
    %v267 = vld [vmem:[%s2 + $0xf0] sm:$0xff]
    %v268 = vld [vmem:[%s2 + $0xf8] sm:$0xff]
    %270 = vset.pattern.permute.xlu0 0
    %271 = vperm.xlu0 %270, %v237
    %v272 = vpop.permute.xlu0 %271
    %275 = vset.pattern.permute.xlu0 0
    %276 = vperm.xlu0 %275, %v238
    %v277 = vpop.permute.xlu0 %276
    %280 = vset.pattern.permute.xlu0 0
    %281 = vperm.xlu0 %280, %v239
    %v282 = vpop.permute.xlu0 %281
    %285 = vset.pattern.permute.xlu0 0
    %286 = vperm.xlu0 %285, %v240
    %v287 = vpop.permute.xlu0 %286
    %290 = vset.pattern.permute.xlu0 0
    %291 = vperm.xlu0 %290, %v241
    %v292 = vpop.permute.xlu0 %291
    %295 = vset.pattern.permute.xlu0 0
    %296 = vperm.xlu0 %295, %v242
    %v297 = vpop.permute.xlu0 %296
    %300 = vset.pattern.permute.xlu0 0
    %301 = vperm.xlu0 %300, %v243
    %v302 = vpop.permute.xlu0 %301
    %305 = vset.pattern.permute.xlu0 0
    %306 = vperm.xlu0 %305, %v244
    %v307 = vpop.permute.xlu0 %306
    %310 = vset.pattern.permute.xlu0 0
    %311 = vperm.xlu0 %310, %v245
    %v312 = vpop.permute.xlu0 %311
    %315 = vset.pattern.permute.xlu0 0
    %316 = vperm.xlu0 %315, %v246
    %v317 = vpop.permute.xlu0 %316
    %320 = vset.pattern.permute.xlu0 0
    %321 = vperm.xlu0 %320, %v247
    %v322 = vpop.permute.xlu0 %321
    %325 = vset.pattern.permute.xlu0 0
    %326 = vperm.xlu0 %325, %v248
    %v327 = vpop.permute.xlu0 %326
    %330 = vset.pattern.permute.xlu0 0
    %331 = vperm.xlu0 %330, %v249
    %v332 = vpop.permute.xlu0 %331
    %335 = vset.pattern.permute.xlu0 0
    %336 = vperm.xlu0 %335, %v250
    %v337 = vpop.permute.xlu0 %336
    %340 = vset.pattern.permute.xlu0 0
    %341 = vperm.xlu0 %340, %v251
    %v342 = vpop.permute.xlu0 %341
    %345 = vset.pattern.permute.xlu0 0
    %346 = vperm.xlu0 %345, %v252
    %v347 = vpop.permute.xlu0 %346
    %350 = vset.pattern.permute.xlu0 0
    %351 = vperm.xlu0 %350, %v253
    %v352 = vpop.permute.xlu0 %351
    %355 = vset.pattern.permute.xlu0 0
    %356 = vperm.xlu0 %355, %v254
    %v357 = vpop.permute.xlu0 %356
    %360 = vset.pattern.permute.xlu0 0
    %361 = vperm.xlu0 %360, %v255
    %v362 = vpop.permute.xlu0 %361
    %365 = vset.pattern.permute.xlu0 0
    %366 = vperm.xlu0 %365, %v256
    %v367 = vpop.permute.xlu0 %366
    %370 = vset.pattern.permute.xlu0 0
    %371 = vperm.xlu0 %370, %v257
    %v372 = vpop.permute.xlu0 %371
    %375 = vset.pattern.permute.xlu0 0
    %376 = vperm.xlu0 %375, %v258
    %v377 = vpop.permute.xlu0 %376
    %380 = vset.pattern.permute.xlu0 0
    %381 = vperm.xlu0 %380, %v259
    %v382 = vpop.permute.xlu0 %381
    %385 = vset.pattern.permute.xlu0 0
    %386 = vperm.xlu0 %385, %v260
    %v387 = vpop.permute.xlu0 %386
    %390 = vset.pattern.permute.xlu0 0
    %391 = vperm.xlu0 %390, %v261
    %v392 = vpop.permute.xlu0 %391
    %395 = vset.pattern.permute.xlu0 0
    %396 = vperm.xlu0 %395, %v262
    %v397 = vpop.permute.xlu0 %396
    %400 = vset.pattern.permute.xlu0 0
    %401 = vperm.xlu0 %400, %v263
    %v402 = vpop.permute.xlu0 %401
    %405 = vset.pattern.permute.xlu0 0
    %406 = vperm.xlu0 %405, %v264
    %v407 = vpop.permute.xlu0 %406
    %410 = vset.pattern.permute.xlu0 0
    %411 = vperm.xlu0 %410, %v265
    %v412 = vpop.permute.xlu0 %411
    %415 = vset.pattern.permute.xlu0 0
    %416 = vperm.xlu0 %415, %v266
    %v417 = vpop.permute.xlu0 %416
    %420 = vset.pattern.permute.xlu0 0
    %421 = vperm.xlu0 %420, %v267
    %v422 = vpop.permute.xlu0 %421
    %425 = vset.pattern.permute.xlu0 0
    %426 = vperm.xlu0 %425, %v268
    %v427 = vpop.permute.xlu0 %426
    %429 = vmatprep.subr.mxu0 0.0
    %430 = vmatpush1.msra.mxu0 %v45
    %431 = vmatprep.subr.mxu0 0.0
    %432 = vmatpush1.msra.mxu0 %v46
    %433 = vmatprep.subr.mxu0 0.0
    %434 = vmatpush1.msra.mxu0 %v47
    %435 = vmatprep.subr.mxu0 0.0
    %436 = vmatpush1.msra.mxu0 %v48
    %437 = vmatprep.subr.mxu0 0.0
    %438 = vmatpush1.msra.mxu0 %v49
    %439 = vmatprep.subr.mxu0 0.0
    %440 = vmatpush1.msra.mxu0 %v50
    %441 = vmatprep.subr.mxu0 0.0
    %442 = vmatpush1.msra.mxu0 %v51
    %443 = vmatprep.subr.mxu0 0.0
    %444 = vmatpush1.msra.mxu0 %v52
    %445 = vmatprep.subr.mxu0 0.0
    %446 = vmatpush1.msra.mxu0 %v53
    %447 = vmatprep.subr.mxu0 0.0
    %448 = vmatpush1.msra.mxu0 %v54
    %449 = vmatprep.subr.mxu0 0.0
    %450 = vmatpush1.msra.mxu0 %v55
    %451 = vmatprep.subr.mxu0 0.0
    %452 = vmatpush1.msra.mxu0 %v56
    %453 = vmatprep.subr.mxu0 0.0
    %454 = vmatpush1.msra.mxu0 %v57
    %455 = vmatprep.subr.mxu0 0.0
    %456 = vmatpush1.msra.mxu0 %v58
    %457 = vmatprep.subr.mxu0 0.0
    %458 = vmatpush1.msra.mxu0 %v59
    %459 = vmatprep.subr.mxu0 0.0
    %460 = vmatpush1.msra.mxu0 %v60
    %461 = vmatprep.subr.mxu0 0.0
    %462 = vmatpush1.msra.mxu0 %v61
    %463 = vmatprep.subr.mxu0 0.0
    %464 = vmatpush1.msra.mxu0 %v62
    %465 = vmatprep.subr.mxu0 0.0
    %466 = vmatpush1.msra.mxu0 %v63
    %467 = vmatprep.subr.mxu0 0.0
    %468 = vmatpush1.msra.mxu0 %v64
    %469 = vmatprep.subr.mxu0 0.0
    %470 = vmatpush1.msra.mxu0 %v65
    %471 = vmatprep.subr.mxu0 0.0
    %472 = vmatpush1.msra.mxu0 %v66
    %473 = vmatprep.subr.mxu0 0.0
    %474 = vmatpush1.msra.mxu0 %v67
    %475 = vmatprep.subr.mxu0 0.0
    %476 = vmatpush1.msra.mxu0 %v68
    %477 = vmatprep.subr.mxu0 0.0
    %478 = vmatpush1.msra.mxu0 %v69
    %479 = vmatprep.subr.mxu0 0.0
    %480 = vmatpush1.msra.mxu0 %v70
    %481 = vmatprep.subr.mxu0 0.0
    %482 = vmatpush1.msra.mxu0 %v71
    %483 = vmatprep.subr.mxu0 0.0
    %484 = vmatpush1.msra.mxu0 %v72
    %485 = vmatprep.subr.mxu0 0.0
    %486 = vmatpush1.msra.mxu0 %v73
    %487 = vmatprep.subr.mxu0 0.0
    %488 = vmatpush1.msra.mxu0 %v74
    %489 = vmatprep.subr.mxu0 0.0
    %490 = vmatpush1.msra.mxu0 %v75
    %491 = vmatprep.subr.mxu0 0.0
    %492 = vmatpush1.msra.mxu0 %v76
    %493 = vmatprep.mubr.f32.mxu0 %v110
    %494 = vmatmul.mubr.f32.gmra.mrb[0].mxu0 %v109
    %v495 = vpop.f32.mrb[0].mxu0
    %v496 = vadd.f32 %v272, %v495
    %v497 = vpop.f32.mrb[0].mxu0
    %498 = vmatprep.mubr.f32.mxu0 %v114
    %499 = vmatmul.mubr.f32.gmra.mrb[0].mxu0 %v113
    %v500 = vpop.f32.mrb[0].mxu0
    %v501 = vadd.f32 %v277, %v500
    %v502 = vpop.f32.mrb[0].mxu0
    %503 = vmatprep.mubr.f32.mxu0 %v118
    %504 = vmatmul.mubr.f32.gmra.mrb[0].mxu0 %v117
    %v505 = vpop.f32.mrb[0].mxu0
    %v506 = vadd.f32 %v282, %v505
    %v507 = vpop.f32.mrb[0].mxu0
    %508 = vmatprep.mubr.f32.mxu0 %v122
    %509 = vmatmul.mubr.f32.gmra.mrb[0].mxu0 %v121
    %v510 = vpop.f32.mrb[0].mxu0
    %v511 = vadd.f32 %v287, %v510
    %v512 = vpop.f32.mrb[0].mxu0
    %513 = vmatprep.mubr.f32.mxu0 %v126
    %514 = vmatmul.mubr.f32.gmra.mrb[0].mxu0 %v125
    %v515 = vpop.f32.mrb[0].mxu0
    %v516 = vadd.f32 %v292, %v515
    %v517 = vpop.f32.mrb[0].mxu0
    %518 = vmatprep.mubr.f32.mxu0 %v130
    %519 = vmatmul.mubr.f32.gmra.mrb[0].mxu0 %v129
    %v520 = vpop.f32.mrb[0].mxu0
    %v521 = vadd.f32 %v297, %v520
    %v522 = vpop.f32.mrb[0].mxu0
    %523 = vmatprep.mubr.f32.mxu0 %v134
    %524 = vmatmul.mubr.f32.gmra.mrb[0].mxu0 %v133
    %v525 = vpop.f32.mrb[0].mxu0
    %v526 = vadd.f32 %v302, %v525
    %v527 = vpop.f32.mrb[0].mxu0
    %528 = vmatprep.mubr.f32.mxu0 %v138
    %529 = vmatmul.mubr.f32.gmra.mrb[0].mxu0 %v137
    %v530 = vpop.f32.mrb[0].mxu0
    %v531 = vadd.f32 %v307, %v530
    %v532 = vpop.f32.mrb[0].mxu0
    %533 = vmatprep.mubr.f32.mxu0 %v142
    %534 = vmatmul.mubr.f32.gmra.mrb[0].mxu0 %v141
    %v535 = vpop.f32.mrb[0].mxu0
    %v536 = vadd.f32 %v312, %v535
    %v537 = vpop.f32.mrb[0].mxu0
    %538 = vmatprep.mubr.f32.mxu0 %v146
    %539 = vmatmul.mubr.f32.gmra.mrb[0].mxu0 %v145
    %v540 = vpop.f32.mrb[0].mxu0
    %v541 = vadd.f32 %v317, %v540
    %v542 = vpop.f32.mrb[0].mxu0
    %543 = vmatprep.mubr.f32.mxu0 %v150
    %544 = vmatmul.mubr.f32.gmra.mrb[0].mxu0 %v149
    %v545 = vpop.f32.mrb[0].mxu0
    %v546 = vadd.f32 %v322, %v545
    %v547 = vpop.f32.mrb[0].mxu0
    %548 = vmatprep.mubr.f32.mxu0 %v154
    %549 = vmatmul.mubr.f32.gmra.mrb[0].mxu0 %v153
    %v550 = vpop.f32.mrb[0].mxu0
    %v551 = vadd.f32 %v327, %v550
    %v552 = vpop.f32.mrb[0].mxu0
    %553 = vmatprep.mubr.f32.mxu0 %v158
    %554 = vmatmul.mubr.f32.gmra.mrb[0].mxu0 %v157
    %v555 = vpop.f32.mrb[0].mxu0
    %v556 = vadd.f32 %v332, %v555
    %v557 = vpop.f32.mrb[0].mxu0
    %558 = vmatprep.mubr.f32.mxu0 %v162
    %559 = vmatmul.mubr.f32.gmra.mrb[0].mxu0 %v161
    %v560 = vpop.f32.mrb[0].mxu0
    %v561 = vadd.f32 %v337, %v560
    %v562 = vpop.f32.mrb[0].mxu0
    %563 = vmatprep.mubr.f32.mxu0 %v166
    %564 = vmatmul.mubr.f32.gmra.mrb[0].mxu0 %v165
    %v565 = vpop.f32.mrb[0].mxu0
    %v566 = vadd.f32 %v342, %v565
    %v567 = vpop.f32.mrb[0].mxu0
    %568 = vmatprep.mubr.f32.mxu0 %v170
    %569 = vmatmul.mubr.f32.gmra.mrb[0].mxu0 %v169
    %v570 = vpop.f32.mrb[0].mxu0
    %v571 = vadd.f32 %v347, %v570
    %v572 = vpop.f32.mrb[0].mxu0
    %573 = vmatprep.mubr.f32.mxu0 %v174
    %574 = vmatmul.mubr.f32.gmra.mrb[0].mxu0 %v173
    %v575 = vpop.f32.mrb[0].mxu0
    %v576 = vadd.f32 %v352, %v575
    %v577 = vpop.f32.mrb[0].mxu0
    %578 = vmatprep.mubr.f32.mxu0 %v178
    %579 = vmatmul.mubr.f32.gmra.mrb[0].mxu0 %v177
    %v580 = vpop.f32.mrb[0].mxu0
    %v581 = vadd.f32 %v357, %v580
    %v582 = vpop.f32.mrb[0].mxu0
    %583 = vmatprep.mubr.f32.mxu0 %v182
    %584 = vmatmul.mubr.f32.gmra.mrb[0].mxu0 %v181
    %v585 = vpop.f32.mrb[0].mxu0
    %v586 = vadd.f32 %v362, %v585
    %v587 = vpop.f32.mrb[0].mxu0
    %588 = vmatprep.mubr.f32.mxu0 %v186
    %589 = vmatmul.mubr.f32.gmra.mrb[0].mxu0 %v185
    %v590 = vpop.f32.mrb[0].mxu0
    %v591 = vadd.f32 %v367, %v590
    %v592 = vpop.f32.mrb[0].mxu0
    %593 = vmatprep.mubr.f32.mxu0 %v190
    %594 = vmatmul.mubr.f32.gmra.mrb[0].mxu0 %v189
    %v595 = vpop.f32.mrb[0].mxu0
    %v596 = vadd.f32 %v372, %v595
    %v597 = vpop.f32.mrb[0].mxu0
    %598 = vmatprep.mubr.f32.mxu0 %v194
    %599 = vmatmul.mubr.f32.gmra.mrb[0].mxu0 %v193
    %v600 = vpop.f32.mrb[0].mxu0
    %v601 = vadd.f32 %v377, %v600
    %v602 = vpop.f32.mrb[0].mxu0
    %603 = vmatprep.mubr.f32.mxu0 %v198
    %604 = vmatmul.mubr.f32.gmra.mrb[0].mxu0 %v197
    %v605 = vpop.f32.mrb[0].mxu0
    %v606 = vadd.f32 %v382, %v605
    %v607 = vpop.f32.mrb[0].mxu0
    %608 = vmatprep.mubr.f32.mxu0 %v202
    %609 = vmatmul.mubr.f32.gmra.mrb[0].mxu0 %v201
    %v610 = vpop.f32.mrb[0].mxu0
    %v611 = vadd.f32 %v387, %v610
    %v612 = vpop.f32.mrb[0].mxu0
    %613 = vmatprep.mubr.f32.mxu0 %v206
    %614 = vmatmul.mubr.f32.gmra.mrb[0].mxu0 %v205
    %v615 = vpop.f32.mrb[0].mxu0
    %v616 = vadd.f32 %v392, %v615
    %v617 = vpop.f32.mrb[0].mxu0
    %618 = vmatprep.mubr.f32.mxu0 %v210
    %619 = vmatmul.mubr.f32.gmra.mrb[0].mxu0 %v209
    %v620 = vpop.f32.mrb[0].mxu0
    %v621 = vadd.f32 %v397, %v620
    %v622 = vpop.f32.mrb[0].mxu0
    %623 = vmatprep.mubr.f32.mxu0 %v214
    %624 = vmatmul.mubr.f32.gmra.mrb[0].mxu0 %v213
    %v625 = vpop.f32.mrb[0].mxu0
    %v626 = vadd.f32 %v402, %v625
    %v627 = vpop.f32.mrb[0].mxu0
    %628 = vmatprep.mubr.f32.mxu0 %v218
    %629 = vmatmul.mubr.f32.gmra.mrb[0].mxu0 %v217
    %v630 = vpop.f32.mrb[0].mxu0
    %v631 = vadd.f32 %v407, %v630
    %v632 = vpop.f32.mrb[0].mxu0
    %633 = vmatprep.mubr.f32.mxu0 %v222
    %634 = vmatmul.mubr.f32.gmra.mrb[0].mxu0 %v221
    %v635 = vpop.f32.mrb[0].mxu0
    %v636 = vadd.f32 %v412, %v635
    %v637 = vpop.f32.mrb[0].mxu0
    %638 = vmatprep.mubr.f32.mxu0 %v226
    %639 = vmatmul.mubr.f32.gmra.mrb[0].mxu0 %v225
    %v640 = vpop.f32.mrb[0].mxu0
    %v641 = vadd.f32 %v417, %v640
    %v642 = vpop.f32.mrb[0].mxu0
    %643 = vmatprep.mubr.f32.mxu0 %v230
    %644 = vmatmul.mubr.f32.gmra.mrb[0].mxu0 %v229
    %v645 = vpop.f32.mrb[0].mxu0
    %v646 = vadd.f32 %v422, %v645
    %v647 = vpop.f32.mrb[0].mxu0
    %648 = vmatprep.mubr.f32.mxu0 %v234
    %649 = vmatmul.mubr.f32.gmra.mrb[0].mxu0 %v233
    %v650 = vpop.f32.mrb[0].mxu0
    %v651 = vadd.f32 %v427, %v650
    %v652 = vpop.f32.mrb[0].mxu0
    %653 = vdwg.mxu0
    %654 = vmatprep.subr.mxu0 0.0
    %655 = vmatpush1.msra.mxu0 %v77
    %656 = vmatprep.subr.mxu0 0.0
    %657 = vmatpush1.msra.mxu0 %v78
    %658 = vmatprep.subr.mxu0 0.0
    %659 = vmatpush1.msra.mxu0 %v79
    %660 = vmatprep.subr.mxu0 0.0
    %661 = vmatpush1.msra.mxu0 %v80
    %662 = vmatprep.subr.mxu0 0.0
    %663 = vmatpush1.msra.mxu0 %v81
    %664 = vmatprep.subr.mxu0 0.0
    %665 = vmatpush1.msra.mxu0 %v82
    %666 = vmatprep.subr.mxu0 0.0
    %667 = vmatpush1.msra.mxu0 %v83
    %668 = vmatprep.subr.mxu0 0.0
    %669 = vmatpush1.msra.mxu0 %v84
    %670 = vmatprep.subr.mxu0 0.0
    %671 = vmatpush1.msra.mxu0 %v85
    %672 = vmatprep.subr.mxu0 0.0
    %673 = vmatpush1.msra.mxu0 %v86
    %674 = vmatprep.subr.mxu0 0.0
    %675 = vmatpush1.msra.mxu0 %v87
    %676 = vmatprep.subr.mxu0 0.0
    %677 = vmatpush1.msra.mxu0 %v88
    %678 = vmatprep.subr.mxu0 0.0
    %679 = vmatpush1.msra.mxu0 %v89
    %680 = vmatprep.subr.mxu0 0.0
    %681 = vmatpush1.msra.mxu0 %v90
    %682 = vmatprep.subr.mxu0 0.0
    %683 = vmatpush1.msra.mxu0 %v91
    %684 = vmatprep.subr.mxu0 0.0
    %685 = vmatpush1.msra.mxu0 %v92
    %686 = vmatprep.subr.mxu0 0.0
    %687 = vmatpush1.msra.mxu0 %v93
    %688 = vmatprep.subr.mxu0 0.0
    %689 = vmatpush1.msra.mxu0 %v94
    %690 = vmatprep.subr.mxu0 0.0
    %691 = vmatpush1.msra.mxu0 %v95
    %692 = vmatprep.subr.mxu0 0.0
    %693 = vmatpush1.msra.mxu0 %v96
    %694 = vmatprep.subr.mxu0 0.0
    %695 = vmatpush1.msra.mxu0 %v97
    %696 = vmatprep.subr.mxu0 0.0
    %697 = vmatpush1.msra.mxu0 %v98
    %698 = vmatprep.subr.mxu0 0.0
    %699 = vmatpush1.msra.mxu0 %v99
    %700 = vmatprep.subr.mxu0 0.0
    %701 = vmatpush1.msra.mxu0 %v100
    %702 = vmatprep.subr.mxu0 0.0
    %703 = vmatpush1.msra.mxu0 %v101
    %704 = vmatprep.subr.mxu0 0.0
    %705 = vmatpush1.msra.mxu0 %v102
    %706 = vmatprep.subr.mxu0 0.0
    %707 = vmatpush1.msra.mxu0 %v103
    %708 = vmatprep.subr.mxu0 0.0
    %709 = vmatpush1.msra.mxu0 %v104
    %710 = vmatprep.subr.mxu0 0.0
    %711 = vmatpush1.msra.mxu0 %v105
    %712 = vmatprep.subr.mxu0 0.0
    %713 = vmatpush1.msra.mxu0 %v106
    %714 = vmatprep.subr.mxu0 0.0
    %715 = vmatpush1.msra.mxu0 %v107
    %716 = vmatprep.subr.mxu0 0.0
    %717 = vmatpush1.msra.mxu0 %v108
    %718 = vmatprep.mubr.f32.mxu0 %v112
    %719 = vmatmul.mubr.f32.gmra.mrb[0].mxu0 %v111
    %v720 = vpop.f32.mrb[0].mxu0
    %v721 = vadd.f32 %v496, %v720
    %v722 = vpop.f32.mrb[0].mxu0
    %723 = vmatprep.mubr.f32.mxu0 %v116
    %724 = vmatmul.mubr.f32.gmra.mrb[0].mxu0 %v115
    %v725 = vpop.f32.mrb[0].mxu0
    %v726 = vadd.f32 %v501, %v725
    %v727 = vpop.f32.mrb[0].mxu0
    %728 = vmatprep.mubr.f32.mxu0 %v120
    %729 = vmatmul.mubr.f32.gmra.mrb[0].mxu0 %v119
    %v730 = vpop.f32.mrb[0].mxu0
    %v731 = vadd.f32 %v506, %v730
    %v732 = vpop.f32.mrb[0].mxu0
    %733 = vmatprep.mubr.f32.mxu0 %v124
    %734 = vmatmul.mubr.f32.gmra.mrb[0].mxu0 %v123
    %v735 = vpop.f32.mrb[0].mxu0
    %v736 = vadd.f32 %v511, %v735
    %v737 = vpop.f32.mrb[0].mxu0
    %738 = vmatprep.mubr.f32.mxu0 %v128
    %739 = vmatmul.mubr.f32.gmra.mrb[0].mxu0 %v127
    %v740 = vpop.f32.mrb[0].mxu0
    %v741 = vadd.f32 %v516, %v740
    %v742 = vpop.f32.mrb[0].mxu0
    %743 = vmatprep.mubr.f32.mxu0 %v132
    %744 = vmatmul.mubr.f32.gmra.mrb[0].mxu0 %v131
    %v745 = vpop.f32.mrb[0].mxu0
    %v746 = vadd.f32 %v521, %v745
    %v747 = vpop.f32.mrb[0].mxu0
    %748 = vmatprep.mubr.f32.mxu0 %v136
    %749 = vmatmul.mubr.f32.gmra.mrb[0].mxu0 %v135
    %v750 = vpop.f32.mrb[0].mxu0
    %v751 = vadd.f32 %v526, %v750
    %v752 = vpop.f32.mrb[0].mxu0
    %753 = vmatprep.mubr.f32.mxu0 %v140
    %754 = vmatmul.mubr.f32.gmra.mrb[0].mxu0 %v139
    %v755 = vpop.f32.mrb[0].mxu0
    %v756 = vadd.f32 %v531, %v755
    %v757 = vpop.f32.mrb[0].mxu0
    %758 = vmatprep.mubr.f32.mxu0 %v144
    %759 = vmatmul.mubr.f32.gmra.mrb[0].mxu0 %v143
    %v760 = vpop.f32.mrb[0].mxu0
    %v761 = vadd.f32 %v536, %v760
    %v762 = vpop.f32.mrb[0].mxu0
    %763 = vmatprep.mubr.f32.mxu0 %v148
    %764 = vmatmul.mubr.f32.gmra.mrb[0].mxu0 %v147
    %v765 = vpop.f32.mrb[0].mxu0
    %v766 = vadd.f32 %v541, %v765
    %v767 = vpop.f32.mrb[0].mxu0
    %768 = vmatprep.mubr.f32.mxu0 %v152
    %769 = vmatmul.mubr.f32.gmra.mrb[0].mxu0 %v151
    %v770 = vpop.f32.mrb[0].mxu0
    %v771 = vadd.f32 %v546, %v770
    %v772 = vpop.f32.mrb[0].mxu0
    %773 = vmatprep.mubr.f32.mxu0 %v156
    %774 = vmatmul.mubr.f32.gmra.mrb[0].mxu0 %v155
    %v775 = vpop.f32.mrb[0].mxu0
    %v776 = vadd.f32 %v551, %v775
    %v777 = vpop.f32.mrb[0].mxu0
    %778 = vmatprep.mubr.f32.mxu0 %v160
    %779 = vmatmul.mubr.f32.gmra.mrb[0].mxu0 %v159
    %v780 = vpop.f32.mrb[0].mxu0
    %v781 = vadd.f32 %v556, %v780
    %v782 = vpop.f32.mrb[0].mxu0
    %783 = vmatprep.mubr.f32.mxu0 %v164
    %784 = vmatmul.mubr.f32.gmra.mrb[0].mxu0 %v163
    %v785 = vpop.f32.mrb[0].mxu0
    %v786 = vadd.f32 %v561, %v785
    %v787 = vpop.f32.mrb[0].mxu0
    %788 = vmatprep.mubr.f32.mxu0 %v168
    %789 = vmatmul.mubr.f32.gmra.mrb[0].mxu0 %v167
    %v790 = vpop.f32.mrb[0].mxu0
    %v791 = vadd.f32 %v566, %v790
    %v792 = vpop.f32.mrb[0].mxu0
    %793 = vmatprep.mubr.f32.mxu0 %v172
    %794 = vmatmul.mubr.f32.gmra.mrb[0].mxu0 %v171
    %v795 = vpop.f32.mrb[0].mxu0
    %v796 = vadd.f32 %v571, %v795
    %v797 = vpop.f32.mrb[0].mxu0
    %798 = vmatprep.mubr.f32.mxu0 %v176
    %799 = vmatmul.mubr.f32.gmra.mrb[0].mxu0 %v175
    %v800 = vpop.f32.mrb[0].mxu0
    %v801 = vadd.f32 %v576, %v800
    %v802 = vpop.f32.mrb[0].mxu0
    %803 = vmatprep.mubr.f32.mxu0 %v180
    %804 = vmatmul.mubr.f32.gmra.mrb[0].mxu0 %v179
    %v805 = vpop.f32.mrb[0].mxu0
    %v806 = vadd.f32 %v581, %v805
    %v807 = vpop.f32.mrb[0].mxu0
    %808 = vmatprep.mubr.f32.mxu0 %v184
    %809 = vmatmul.mubr.f32.gmra.mrb[0].mxu0 %v183
    %v810 = vpop.f32.mrb[0].mxu0
    %v811 = vadd.f32 %v586, %v810
    %v812 = vpop.f32.mrb[0].mxu0
    %813 = vmatprep.mubr.f32.mxu0 %v188
    %814 = vmatmul.mubr.f32.gmra.mrb[0].mxu0 %v187
    %v815 = vpop.f32.mrb[0].mxu0
    %v816 = vadd.f32 %v591, %v815
    %v817 = vpop.f32.mrb[0].mxu0
    %818 = vmatprep.mubr.f32.mxu0 %v192
    %819 = vmatmul.mubr.f32.gmra.mrb[0].mxu0 %v191
    %v820 = vpop.f32.mrb[0].mxu0
    %v821 = vadd.f32 %v596, %v820
    %v822 = vpop.f32.mrb[0].mxu0
    %823 = vmatprep.mubr.f32.mxu0 %v196
    %824 = vmatmul.mubr.f32.gmra.mrb[0].mxu0 %v195
    %v825 = vpop.f32.mrb[0].mxu0
    %v826 = vadd.f32 %v601, %v825
    %v827 = vpop.f32.mrb[0].mxu0
    %828 = vmatprep.mubr.f32.mxu0 %v200
    %829 = vmatmul.mubr.f32.gmra.mrb[0].mxu0 %v199
    %v830 = vpop.f32.mrb[0].mxu0
    %v831 = vadd.f32 %v606, %v830
    %v832 = vpop.f32.mrb[0].mxu0
    %833 = vmatprep.mubr.f32.mxu0 %v204
    %834 = vmatmul.mubr.f32.gmra.mrb[0].mxu0 %v203
    %v835 = vpop.f32.mrb[0].mxu0
    %v836 = vadd.f32 %v611, %v835
    %v837 = vpop.f32.mrb[0].mxu0
    %838 = vmatprep.mubr.f32.mxu0 %v208
    %839 = vmatmul.mubr.f32.gmra.mrb[0].mxu0 %v207
    %v840 = vpop.f32.mrb[0].mxu0
    %v841 = vadd.f32 %v616, %v840
    %v842 = vpop.f32.mrb[0].mxu0
    %843 = vmatprep.mubr.f32.mxu0 %v212
    %844 = vmatmul.mubr.f32.gmra.mrb[0].mxu0 %v211
    %v845 = vpop.f32.mrb[0].mxu0
    %v846 = vadd.f32 %v621, %v845
    %v847 = vpop.f32.mrb[0].mxu0
    %848 = vmatprep.mubr.f32.mxu0 %v216
    %849 = vmatmul.mubr.f32.gmra.mrb[0].mxu0 %v215
    %v850 = vpop.f32.mrb[0].mxu0
    %v851 = vadd.f32 %v626, %v850
    %v852 = vpop.f32.mrb[0].mxu0
    %853 = vmatprep.mubr.f32.mxu0 %v220
    %854 = vmatmul.mubr.f32.gmra.mrb[0].mxu0 %v219
    %v855 = vpop.f32.mrb[0].mxu0
    %v856 = vadd.f32 %v631, %v855
    %v857 = vpop.f32.mrb[0].mxu0
    %858 = vmatprep.mubr.f32.mxu0 %v224
    %859 = vmatmul.mubr.f32.gmra.mrb[0].mxu0 %v223
    %v860 = vpop.f32.mrb[0].mxu0
    %v861 = vadd.f32 %v636, %v860
    %v862 = vpop.f32.mrb[0].mxu0
    %863 = vmatprep.mubr.f32.mxu0 %v228
    %864 = vmatmul.mubr.f32.gmra.mrb[0].mxu0 %v227
    %v865 = vpop.f32.mrb[0].mxu0
    %v866 = vadd.f32 %v641, %v865
    %v867 = vpop.f32.mrb[0].mxu0
    %868 = vmatprep.mubr.f32.mxu0 %v232
    %869 = vmatmul.mubr.f32.gmra.mrb[0].mxu0 %v231
    %v870 = vpop.f32.mrb[0].mxu0
    %v871 = vadd.f32 %v646, %v870
    %v872 = vpop.f32.mrb[0].mxu0
    %873 = vmatprep.mubr.f32.mxu0 %v236
    %874 = vmatmul.mubr.f32.gmra.mrb[0].mxu0 %v235
    %v875 = vpop.f32.mrb[0].mxu0
    %v876 = vadd.f32 %v651, %v875
    %v877 = vpop.f32.mrb[0].mxu0
    %878 = vdwg.mxu0
    %v879 = vmax.f32 %v721, 0.0
    %v880 = vmax.f32 %v726, 0.0
    %v881 = vmax.f32 %v731, 0.0
    %v882 = vmax.f32 %v736, 0.0
    %v883 = vmax.f32 %v741, 0.0
    %v884 = vmax.f32 %v746, 0.0
    %v885 = vmax.f32 %v751, 0.0
    %v886 = vmax.f32 %v756, 0.0
    %v887 = vmax.f32 %v761, 0.0
    %v888 = vmax.f32 %v766, 0.0
    %v889 = vmax.f32 %v771, 0.0
    %v890 = vmax.f32 %v776, 0.0
    %v891 = vmax.f32 %v781, 0.0
    %v892 = vmax.f32 %v786, 0.0
    %v893 = vmax.f32 %v791, 0.0
    %v894 = vmax.f32 %v796, 0.0
    %v895 = vmax.f32 %v801, 0.0
    %v896 = vmax.f32 %v806, 0.0
    %v897 = vmax.f32 %v811, 0.0
    %v898 = vmax.f32 %v816, 0.0
    %v899 = vmax.f32 %v821, 0.0
    %v900 = vmax.f32 %v826, 0.0
    %v901 = vmax.f32 %v831, 0.0
    %v902 = vmax.f32 %v836, 0.0
    %v903 = vmax.f32 %v841, 0.0
    %v904 = vmax.f32 %v846, 0.0
    %v905 = vmax.f32 %v851, 0.0
    %v906 = vmax.f32 %v856, 0.0
    %v907 = vmax.f32 %v861, 0.0
    %v908 = vmax.f32 %v866, 0.0
    %v909 = vmax.f32 %v871, 0.0
    %v910 = vmax.f32 %v876, 0.0
    %v911 = vld [vmem:[%s3] sm:$0xff]
    %v912 = vld [vmem:[%s3 + $0x8] sm:$0xff]
    %v913 = vld [vmem:[%s3 + $0x10] sm:$0xff]
    %v914 = vld [vmem:[%s3 + $0x18] sm:$0xff]
    %v915 = vld [vmem:[%s3 + $0x20] sm:$0xff]
    %v916 = vld [vmem:[%s3 + $0x28] sm:$0xff]
    %v917 = vld [vmem:[%s3 + $0x30] sm:$0xff]
    %v918 = vld [vmem:[%s3 + $0x38] sm:$0xff]
    %v919 = vld [vmem:[%s3 + $0x40] sm:$0xff]
    %v920 = vld [vmem:[%s3 + $0x48] sm:$0xff]
    %v921 = vld [vmem:[%s3 + $0x50] sm:$0xff]
    %v922 = vld [vmem:[%s3 + $0x58] sm:$0xff]
    %v923 = vld [vmem:[%s3 + $0x60] sm:$0xff]
    %v924 = vld [vmem:[%s3 + $0x68] sm:$0xff]
    %v925 = vld [vmem:[%s3 + $0x70] sm:$0xff]
    %v926 = vld [vmem:[%s3 + $0x78] sm:$0xff]
    %v927 = vld [vmem:[%s3 + $0x80] sm:$0xff]
    %v928 = vld [vmem:[%s3 + $0x88] sm:$0xff]
    %v929 = vld [vmem:[%s3 + $0x90] sm:$0xff]
    %v930 = vld [vmem:[%s3 + $0x98] sm:$0xff]
    %v931 = vld [vmem:[%s3 + $0xa0] sm:$0xff]
    %v932 = vld [vmem:[%s3 + $0xa8] sm:$0xff]
    %v933 = vld [vmem:[%s3 + $0xb0] sm:$0xff]
    %v934 = vld [vmem:[%s3 + $0xb8] sm:$0xff]
    %v935 = vld [vmem:[%s3 + $0xc0] sm:$0xff]
    %v936 = vld [vmem:[%s3 + $0xc8] sm:$0xff]
    %v937 = vld [vmem:[%s3 + $0xd0] sm:$0xff]
    %v938 = vld [vmem:[%s3 + $0xd8] sm:$0xff]
    %v939 = vld [vmem:[%s3 + $0xe0] sm:$0xff]
    %v940 = vld [vmem:[%s3 + $0xe8] sm:$0xff]
    %v941 = vld [vmem:[%s3 + $0xf0] sm:$0xff]
    %v942 = vld [vmem:[%s3 + $0xf8] sm:$0xff]
    %v943 = vld [vmem:[%s4] sm:$0xff]
    %v944 = vld [vmem:[%s4 + $0x8] sm:$0xff]
    %v945 = vld [vmem:[%s4 + $0x10] sm:$0xff]
    %v946 = vld [vmem:[%s4 + $0x18] sm:$0xff]
    %v947 = vld [vmem:[%s4 + $0x20] sm:$0xff]
    %v948 = vld [vmem:[%s4 + $0x28] sm:$0xff]
    %v949 = vld [vmem:[%s4 + $0x30] sm:$0xff]
    %v950 = vld [vmem:[%s4 + $0x38] sm:$0xff]
    %v951 = vld [vmem:[%s4 + $0x40] sm:$0xff]
    %v952 = vld [vmem:[%s4 + $0x48] sm:$0xff]
    %v953 = vld [vmem:[%s4 + $0x50] sm:$0xff]
    %v954 = vld [vmem:[%s4 + $0x58] sm:$0xff]
    %v955 = vld [vmem:[%s4 + $0x60] sm:$0xff]
    %v956 = vld [vmem:[%s4 + $0x68] sm:$0xff]
    %v957 = vld [vmem:[%s4 + $0x70] sm:$0xff]
    %v958 = vld [vmem:[%s4 + $0x78] sm:$0xff]
    %960 = vset.pattern.permute.xlu0 0
    %961 = vperm.xlu0 %960, %v943
    %v962 = vpop.permute.xlu0 %961
    %965 = vset.pattern.permute.xlu0 0
    %966 = vperm.xlu0 %965, %v944
    %v967 = vpop.permute.xlu0 %966
    %970 = vset.pattern.permute.xlu0 0
    %971 = vperm.xlu0 %970, %v945
    %v972 = vpop.permute.xlu0 %971
    %975 = vset.pattern.permute.xlu0 0
    %976 = vperm.xlu0 %975, %v946
    %v977 = vpop.permute.xlu0 %976
    %980 = vset.pattern.permute.xlu0 0
    %981 = vperm.xlu0 %980, %v947
    %v982 = vpop.permute.xlu0 %981
    %985 = vset.pattern.permute.xlu0 0
    %986 = vperm.xlu0 %985, %v948
    %v987 = vpop.permute.xlu0 %986
    %990 = vset.pattern.permute.xlu0 0
    %991 = vperm.xlu0 %990, %v949
    %v992 = vpop.permute.xlu0 %991
    %995 = vset.pattern.permute.xlu0 0
    %996 = vperm.xlu0 %995, %v950
    %v997 = vpop.permute.xlu0 %996
    %1000 = vset.pattern.permute.xlu0 0
    %1001 = vperm.xlu0 %1000, %v951
    %v1002 = vpop.permute.xlu0 %1001
    %1005 = vset.pattern.permute.xlu0 0
    %1006 = vperm.xlu0 %1005, %v952
    %v1007 = vpop.permute.xlu0 %1006
    %1010 = vset.pattern.permute.xlu0 0
    %1011 = vperm.xlu0 %1010, %v953
    %v1012 = vpop.permute.xlu0 %1011
    %1015 = vset.pattern.permute.xlu0 0
    %1016 = vperm.xlu0 %1015, %v954
    %v1017 = vpop.permute.xlu0 %1016
    %1020 = vset.pattern.permute.xlu0 0
    %1021 = vperm.xlu0 %1020, %v955
    %v1022 = vpop.permute.xlu0 %1021
    %1025 = vset.pattern.permute.xlu0 0
    %1026 = vperm.xlu0 %1025, %v956
    %v1027 = vpop.permute.xlu0 %1026
    %1030 = vset.pattern.permute.xlu0 0
    %1031 = vperm.xlu0 %1030, %v957
    %v1032 = vpop.permute.xlu0 %1031
    %1035 = vset.pattern.permute.xlu0 0
    %1036 = vperm.xlu0 %1035, %v958
    %v1037 = vpop.permute.xlu0 %1036
    %1039 = vmatprep.subr.mxu0 0.0
    %1040 = vmatpush1.msra.mxu0 %v879
    %1041 = vmatprep.subr.mxu0 0.0
    %1042 = vmatpush1.msra.mxu0 %v880
    %1043 = vmatprep.subr.mxu0 0.0
    %1044 = vmatpush1.msra.mxu0 %v881
    %1045 = vmatprep.subr.mxu0 0.0
    %1046 = vmatpush1.msra.mxu0 %v882
    %1047 = vmatprep.subr.mxu0 0.0
    %1048 = vmatpush1.msra.mxu0 %v883
    %1049 = vmatprep.subr.mxu0 0.0
    %1050 = vmatpush1.msra.mxu0 %v884
    %1051 = vmatprep.subr.mxu0 0.0
    %1052 = vmatpush1.msra.mxu0 %v885
    %1053 = vmatprep.subr.mxu0 0.0
    %1054 = vmatpush1.msra.mxu0 %v886
    %1055 = vmatprep.subr.mxu0 0.0
    %1056 = vmatpush1.msra.mxu0 %v887
    %1057 = vmatprep.subr.mxu0 0.0
    %1058 = vmatpush1.msra.mxu0 %v888
    %1059 = vmatprep.subr.mxu0 0.0
    %1060 = vmatpush1.msra.mxu0 %v889
    %1061 = vmatprep.subr.mxu0 0.0
    %1062 = vmatpush1.msra.mxu0 %v890
    %1063 = vmatprep.subr.mxu0 0.0
    %1064 = vmatpush1.msra.mxu0 %v891
    %1065 = vmatprep.subr.mxu0 0.0
    %1066 = vmatpush1.msra.mxu0 %v892
    %1067 = vmatprep.subr.mxu0 0.0
    %1068 = vmatpush1.msra.mxu0 %v893
    %1069 = vmatprep.subr.mxu0 0.0
    %1070 = vmatpush1.msra.mxu0 %v894
    %1071 = vmatprep.subr.mxu0 0.0
    %1072 = vmatpush1.msra.mxu0 %v895
    %1073 = vmatprep.subr.mxu0 0.0
    %1074 = vmatpush1.msra.mxu0 %v896
    %1075 = vmatprep.subr.mxu0 0.0
    %1076 = vmatpush1.msra.mxu0 %v897
    %1077 = vmatprep.subr.mxu0 0.0
    %1078 = vmatpush1.msra.mxu0 %v898
    %1079 = vmatprep.subr.mxu0 0.0
    %1080 = vmatpush1.msra.mxu0 %v899
    %1081 = vmatprep.subr.mxu0 0.0
    %1082 = vmatpush1.msra.mxu0 %v900
    %1083 = vmatprep.subr.mxu0 0.0
    %1084 = vmatpush1.msra.mxu0 %v901
    %1085 = vmatprep.subr.mxu0 0.0
    %1086 = vmatpush1.msra.mxu0 %v902
    %1087 = vmatprep.subr.mxu0 0.0
    %1088 = vmatpush1.msra.mxu0 %v903
    %1089 = vmatprep.subr.mxu0 0.0
    %1090 = vmatpush1.msra.mxu0 %v904
    %1091 = vmatprep.subr.mxu0 0.0
    %1092 = vmatpush1.msra.mxu0 %v905
    %1093 = vmatprep.subr.mxu0 0.0
    %1094 = vmatpush1.msra.mxu0 %v906
    %1095 = vmatprep.subr.mxu0 0.0
    %1096 = vmatpush1.msra.mxu0 %v907
    %1097 = vmatprep.subr.mxu0 0.0
    %1098 = vmatpush1.msra.mxu0 %v908
    %1099 = vmatprep.subr.mxu0 0.0
    %1100 = vmatpush1.msra.mxu0 %v909
    %1101 = vmatprep.subr.mxu0 0.0
    %1102 = vmatpush1.msra.mxu0 %v910
    %1103 = vmatprep.mubr.f32.mxu0 %v912
    %1104 = vmatmul.mubr.f32.gmra.mrb[0].mxu0 %v911
    %v1105 = vpop.f32.mrb[0].mxu0
    %v1106 = vadd.f32 %v962, %v1105
    %v1107 = vpop.f32.mrb[0].mxu0
    %1108 = vmatprep.mubr.f32.mxu0 %v914
    %1109 = vmatmul.mubr.f32.gmra.mrb[0].mxu0 %v913
    %v1110 = vpop.f32.mrb[0].mxu0
    %v1111 = vadd.f32 %v967, %v1110
    %v1112 = vpop.f32.mrb[0].mxu0
    %1113 = vmatprep.mubr.f32.mxu0 %v916
    %1114 = vmatmul.mubr.f32.gmra.mrb[0].mxu0 %v915
    %v1115 = vpop.f32.mrb[0].mxu0
    %v1116 = vadd.f32 %v972, %v1115
    %v1117 = vpop.f32.mrb[0].mxu0
    %1118 = vmatprep.mubr.f32.mxu0 %v918
    %1119 = vmatmul.mubr.f32.gmra.mrb[0].mxu0 %v917
    %v1120 = vpop.f32.mrb[0].mxu0
    %v1121 = vadd.f32 %v977, %v1120
    %v1122 = vpop.f32.mrb[0].mxu0
    %1123 = vmatprep.mubr.f32.mxu0 %v920
    %1124 = vmatmul.mubr.f32.gmra.mrb[0].mxu0 %v919
    %v1125 = vpop.f32.mrb[0].mxu0
    %v1126 = vadd.f32 %v982, %v1125
    %v1127 = vpop.f32.mrb[0].mxu0
    %1128 = vmatprep.mubr.f32.mxu0 %v922
    %1129 = vmatmul.mubr.f32.gmra.mrb[0].mxu0 %v921
    %v1130 = vpop.f32.mrb[0].mxu0
    %v1131 = vadd.f32 %v987, %v1130
    %v1132 = vpop.f32.mrb[0].mxu0
    %1133 = vmatprep.mubr.f32.mxu0 %v924
    %1134 = vmatmul.mubr.f32.gmra.mrb[0].mxu0 %v923
    %v1135 = vpop.f32.mrb[0].mxu0
    %v1136 = vadd.f32 %v992, %v1135
    %v1137 = vpop.f32.mrb[0].mxu0
    %1138 = vmatprep.mubr.f32.mxu0 %v926
    %1139 = vmatmul.mubr.f32.gmra.mrb[0].mxu0 %v925
    %v1140 = vpop.f32.mrb[0].mxu0
    %v1141 = vadd.f32 %v997, %v1140
    %v1142 = vpop.f32.mrb[0].mxu0
    %1143 = vmatprep.mubr.f32.mxu0 %v928
    %1144 = vmatmul.mubr.f32.gmra.mrb[0].mxu0 %v927
    %v1145 = vpop.f32.mrb[0].mxu0
    %v1146 = vadd.f32 %v1002, %v1145
    %v1147 = vpop.f32.mrb[0].mxu0
    %1148 = vmatprep.mubr.f32.mxu0 %v930
    %1149 = vmatmul.mubr.f32.gmra.mrb[0].mxu0 %v929
    %v1150 = vpop.f32.mrb[0].mxu0
    %v1151 = vadd.f32 %v1007, %v1150
    %v1152 = vpop.f32.mrb[0].mxu0
    %1153 = vmatprep.mubr.f32.mxu0 %v932
    %1154 = vmatmul.mubr.f32.gmra.mrb[0].mxu0 %v931
    %v1155 = vpop.f32.mrb[0].mxu0
    %v1156 = vadd.f32 %v1012, %v1155
    %v1157 = vpop.f32.mrb[0].mxu0
    %1158 = vmatprep.mubr.f32.mxu0 %v934
    %1159 = vmatmul.mubr.f32.gmra.mrb[0].mxu0 %v933
    %v1160 = vpop.f32.mrb[0].mxu0
    %v1161 = vadd.f32 %v1017, %v1160
    %v1162 = vpop.f32.mrb[0].mxu0
    %1163 = vmatprep.mubr.f32.mxu0 %v936
    %1164 = vmatmul.mubr.f32.gmra.mrb[0].mxu0 %v935
    %v1165 = vpop.f32.mrb[0].mxu0
    %v1166 = vadd.f32 %v1022, %v1165
    %v1167 = vpop.f32.mrb[0].mxu0
    %1168 = vmatprep.mubr.f32.mxu0 %v938
    %1169 = vmatmul.mubr.f32.gmra.mrb[0].mxu0 %v937
    %v1170 = vpop.f32.mrb[0].mxu0
    %v1171 = vadd.f32 %v1027, %v1170
    %v1172 = vpop.f32.mrb[0].mxu0
    %1173 = vmatprep.mubr.f32.mxu0 %v940
    %1174 = vmatmul.mubr.f32.gmra.mrb[0].mxu0 %v939
    %v1175 = vpop.f32.mrb[0].mxu0
    %v1176 = vadd.f32 %v1032, %v1175
    %v1177 = vpop.f32.mrb[0].mxu0
    %1178 = vmatprep.mubr.f32.mxu0 %v942
    %1179 = vmatmul.mubr.f32.gmra.mrb[0].mxu0 %v941
    %v1180 = vpop.f32.mrb[0].mxu0
    %v1181 = vadd.f32 %v1037, %v1180
    %v1182 = vpop.f32.mrb[0].mxu0
    %1183 = vdwg.mxu0
    %v1184 = vmax.f32 %v1106, 0.0
    %v1185 = vmax.f32 %v1111, 0.0
    %v1186 = vmax.f32 %v1116, 0.0
    %v1187 = vmax.f32 %v1121, 0.0
    %v1188 = vmax.f32 %v1126, 0.0
    %v1189 = vmax.f32 %v1131, 0.0
    %v1190 = vmax.f32 %v1136, 0.0
    %v1191 = vmax.f32 %v1141, 0.0
    %v1192 = vmax.f32 %v1146, 0.0
    %v1193 = vmax.f32 %v1151, 0.0
    %v1194 = vmax.f32 %v1156, 0.0
    %v1195 = vmax.f32 %v1161, 0.0
    %v1196 = vmax.f32 %v1166, 0.0
    %v1197 = vmax.f32 %v1171, 0.0
    %v1198 = vmax.f32 %v1176, 0.0
    %v1199 = vmax.f32 %v1181, 0.0
    %v1200 = vld [vmem:[%s5] sm:$0xff]
    %v1201 = vld [vmem:[%s5 + $0x8] sm:$0xff]
    %v1202 = vld [vmem:[%s5 + $0x10] sm:$0xff]
    %v1203 = vld [vmem:[%s5 + $0x18] sm:$0xff]
    %v1204 = vld [vmem:[%s5 + $0x20] sm:$0xff]
    %v1205 = vld [vmem:[%s5 + $0x28] sm:$0xff]
    %v1206 = vld [vmem:[%s5 + $0x30] sm:$0xff]
    %v1207 = vld [vmem:[%s5 + $0x38] sm:$0xff]
    %v1208 = vld [vmem:[%s6] sm:$0xff]
    %v1209 = vld [vmem:[%s6 + $0x8] sm:$0xff]
    %v1210 = vld [vmem:[%s6 + $0x10] sm:$0xff]
    %v1211 = vld [vmem:[%s6 + $0x18] sm:$0xff]
    %v1212 = vld [vmem:[%s6 + $0x20] sm:$0xff]
    %v1213 = vld [vmem:[%s6 + $0x28] sm:$0xff]
    %v1214 = vld [vmem:[%s6 + $0x30] sm:$0xff]
    %v1215 = vld [vmem:[%s6 + $0x38] sm:$0xff]
    %1217 = vset.pattern.permute.xlu0 0
    %1218 = vperm.xlu0 %1217, %v1208
    %v1219 = vpop.permute.xlu0 %1218
    %1222 = vset.pattern.permute.xlu0 0
    %1223 = vperm.xlu0 %1222, %v1209
    %v1224 = vpop.permute.xlu0 %1223
    %1227 = vset.pattern.permute.xlu0 0
    %1228 = vperm.xlu0 %1227, %v1210
    %v1229 = vpop.permute.xlu0 %1228
    %1232 = vset.pattern.permute.xlu0 0
    %1233 = vperm.xlu0 %1232, %v1211
    %v1234 = vpop.permute.xlu0 %1233
    %1237 = vset.pattern.permute.xlu0 0
    %1238 = vperm.xlu0 %1237, %v1212
    %v1239 = vpop.permute.xlu0 %1238
    %1242 = vset.pattern.permute.xlu0 0
    %1243 = vperm.xlu0 %1242, %v1213
    %v1244 = vpop.permute.xlu0 %1243
    %1247 = vset.pattern.permute.xlu0 0
    %1248 = vperm.xlu0 %1247, %v1214
    %v1249 = vpop.permute.xlu0 %1248
    %1252 = vset.pattern.permute.xlu0 0
    %1253 = vperm.xlu0 %1252, %v1215
    %v1254 = vpop.permute.xlu0 %1253
    %1256 = vmatprep.subr.mxu0 0.0
    %1257 = vmatpush1.msra.mxu0 %v1184
    %1258 = vmatprep.subr.mxu0 0.0
    %1259 = vmatpush1.msra.mxu0 %v1185
    %1260 = vmatprep.subr.mxu0 0.0
    %1261 = vmatpush1.msra.mxu0 %v1186
    %1262 = vmatprep.subr.mxu0 0.0
    %1263 = vmatpush1.msra.mxu0 %v1187
    %1264 = vmatprep.subr.mxu0 0.0
    %1265 = vmatpush1.msra.mxu0 %v1188
    %1266 = vmatprep.subr.mxu0 0.0
    %1267 = vmatpush1.msra.mxu0 %v1189
    %1268 = vmatprep.subr.mxu0 0.0
    %1269 = vmatpush1.msra.mxu0 %v1190
    %1270 = vmatprep.subr.mxu0 0.0
    %1271 = vmatpush1.msra.mxu0 %v1191
    %1272 = vmatprep.subr.mxu0 0.0
    %1273 = vmatpush1.msra.mxu0 %v1192
    %1274 = vmatprep.subr.mxu0 0.0
    %1275 = vmatpush1.msra.mxu0 %v1193
    %1276 = vmatprep.subr.mxu0 0.0
    %1277 = vmatpush1.msra.mxu0 %v1194
    %1278 = vmatprep.subr.mxu0 0.0
    %1279 = vmatpush1.msra.mxu0 %v1195
    %1280 = vmatprep.subr.mxu0 0.0
    %1281 = vmatpush1.msra.mxu0 %v1196
    %1282 = vmatprep.subr.mxu0 0.0
    %1283 = vmatpush1.msra.mxu0 %v1197
    %1284 = vmatprep.subr.mxu0 0.0
    %1285 = vmatpush1.msra.mxu0 %v1198
    %1286 = vmatprep.subr.mxu0 0.0
    %1287 = vmatpush1.msra.mxu0 %v1199
    %1288 = vmatprep.subr.mxu0 0.0
    %1289 = vmatpush1.msra.mxu0 0.0
    %1290 = vmatprep.subr.mxu0 0.0
    %1291 = vmatpush1.msra.mxu0 0.0
    %1292 = vmatprep.subr.mxu0 0.0
    %1293 = vmatpush1.msra.mxu0 0.0
    %1294 = vmatprep.subr.mxu0 0.0
    %1295 = vmatpush1.msra.mxu0 0.0
    %1296 = vmatprep.subr.mxu0 0.0
    %1297 = vmatpush1.msra.mxu0 0.0
    %1298 = vmatprep.subr.mxu0 0.0
    %1299 = vmatpush1.msra.mxu0 0.0
    %1300 = vmatprep.subr.mxu0 0.0
    %1301 = vmatpush1.msra.mxu0 0.0
    %1302 = vmatprep.subr.mxu0 0.0
    %1303 = vmatpush1.msra.mxu0 0.0
    %1304 = vmatprep.subr.mxu0 0.0
    %1305 = vmatpush1.msra.mxu0 0.0
    %1306 = vmatprep.subr.mxu0 0.0
    %1307 = vmatpush1.msra.mxu0 0.0
    %1308 = vmatprep.subr.mxu0 0.0
    %1309 = vmatpush1.msra.mxu0 0.0
    %1310 = vmatprep.subr.mxu0 0.0
    %1311 = vmatpush1.msra.mxu0 0.0
    %1312 = vmatprep.subr.mxu0 0.0
    %1313 = vmatpush1.msra.mxu0 0.0
    %1314 = vmatprep.subr.mxu0 0.0
    %1315 = vmatpush1.msra.mxu0 0.0
    %1316 = vmatprep.subr.mxu0 0.0
    %1317 = vmatpush1.msra.mxu0 0.0
    %1318 = vmatprep.subr.mxu0 0.0
    %1319 = vmatpush1.msra.mxu0 0.0
    %1320 = vmatprep.mubr.f32.mxu0 0.0
    %1321 = vmatmul.mubr.f32.gmra.mrb[0].mxu0 %v1200
    %v1322 = vpop.f32.mrb[0].mxu0
    %v1323 = vadd.f32 %v1219, %v1322
    %v1324 = vpop.f32.mrb[0].mxu0
    %1325 = vmatprep.mubr.f32.mxu0 0.0
    %1326 = vmatmul.mubr.f32.gmra.mrb[0].mxu0 %v1201
    %v1327 = vpop.f32.mrb[0].mxu0
    %v1328 = vadd.f32 %v1224, %v1327
    %v1329 = vpop.f32.mrb[0].mxu0
    %1330 = vmatprep.mubr.f32.mxu0 0.0
    %1331 = vmatmul.mubr.f32.gmra.mrb[0].mxu0 %v1202
    %v1332 = vpop.f32.mrb[0].mxu0
    %v1333 = vadd.f32 %v1229, %v1332
    %v1334 = vpop.f32.mrb[0].mxu0
    %1335 = vmatprep.mubr.f32.mxu0 0.0
    %1336 = vmatmul.mubr.f32.gmra.mrb[0].mxu0 %v1203
    %v1337 = vpop.f32.mrb[0].mxu0
    %v1338 = vadd.f32 %v1234, %v1337
    %v1339 = vpop.f32.mrb[0].mxu0
    %1340 = vmatprep.mubr.f32.mxu0 0.0
    %1341 = vmatmul.mubr.f32.gmra.mrb[0].mxu0 %v1204
    %v1342 = vpop.f32.mrb[0].mxu0
    %v1343 = vadd.f32 %v1239, %v1342
    %v1344 = vpop.f32.mrb[0].mxu0
    %1345 = vmatprep.mubr.f32.mxu0 0.0
    %1346 = vmatmul.mubr.f32.gmra.mrb[0].mxu0 %v1205
    %v1347 = vpop.f32.mrb[0].mxu0
    %v1348 = vadd.f32 %v1244, %v1347
    %v1349 = vpop.f32.mrb[0].mxu0
    %1350 = vmatprep.mubr.f32.mxu0 0.0
    %1351 = vmatmul.mubr.f32.gmra.mrb[0].mxu0 %v1206
    %v1352 = vpop.f32.mrb[0].mxu0
    %v1353 = vadd.f32 %v1249, %v1352
    %v1354 = vpop.f32.mrb[0].mxu0
    %1355 = vmatprep.mubr.f32.mxu0 0.0
    %1356 = vmatmul.mubr.f32.gmra.mrb[0].mxu0 %v1207
    %v1357 = vpop.f32.mrb[0].mxu0
    %v1358 = vadd.f32 %v1254, %v1357
    %v1359 = vpop.f32.mrb[0].mxu0
    %1360 = vdwg.mxu0
    %v1361 = vmax.f32 %v1323, 0.0
    %v1362 = vmax.f32 %v1328, 0.0
    %v1363 = vmax.f32 %v1333, 0.0
    %v1364 = vmax.f32 %v1338, 0.0
    %v1365 = vmax.f32 %v1343, 0.0
    %v1366 = vmax.f32 %v1348, 0.0
    %v1367 = vmax.f32 %v1353, 0.0
    %v1368 = vmax.f32 %v1358, 0.0
    %v1369 = vld [vmem:[%s7] sm:$0xff]
    %v1370 = vld [vmem:[%s7 + $0x8] sm:$0xff]
    %v1371 = vld [vmem:[%s7 + $0x10] sm:$0xff]
    %v1372 = vld [vmem:[%s7 + $0x18] sm:$0xff]
    %v1373 = vld [vmem:[%s8] sm:$0xff]
    %v1374 = vld [vmem:[%s8 + $0x8] sm:$0xff]
    %v1375 = vld [vmem:[%s8 + $0x10] sm:$0xff]
    %v1376 = vld [vmem:[%s8 + $0x18] sm:$0xff]
    %1378 = vset.pattern.permute.xlu0 0
    %1379 = vperm.xlu0 %1378, %v1373
    %v1380 = vpop.permute.xlu0 %1379
    %1383 = vset.pattern.permute.xlu0 0
    %1384 = vperm.xlu0 %1383, %v1374
    %v1385 = vpop.permute.xlu0 %1384
    %1388 = vset.pattern.permute.xlu0 0
    %1389 = vperm.xlu0 %1388, %v1375
    %v1390 = vpop.permute.xlu0 %1389
    %1393 = vset.pattern.permute.xlu0 0
    %1394 = vperm.xlu0 %1393, %v1376
    %v1395 = vpop.permute.xlu0 %1394
    %vm1397 = vcmask 523264
    %v1399 = vsel %vm1397, %v1369, 0
    %v1402 = vsel %vm1397, %v1370, 0
    %v1405 = vsel %vm1397, %v1371, 0
    %v1408 = vsel %vm1397, %v1372, 0
    %1410 = vmatprep.subr.mxu0 0.0
    %1411 = vmatpush1.msra.mxu0 %v1361
    %1412 = vmatprep.subr.mxu0 0.0
    %1413 = vmatpush1.msra.mxu0 %v1362
    %1414 = vmatprep.subr.mxu0 0.0
    %1415 = vmatpush1.msra.mxu0 %v1363
    %1416 = vmatprep.subr.mxu0 0.0
    %1417 = vmatpush1.msra.mxu0 %v1364
    %1418 = vmatprep.subr.mxu0 0.0
    %1419 = vmatpush1.msra.mxu0 %v1365
    %1420 = vmatprep.subr.mxu0 0.0
    %1421 = vmatpush1.msra.mxu0 %v1366
    %1422 = vmatprep.subr.mxu0 0.0
    %1423 = vmatpush1.msra.mxu0 %v1367
    %1424 = vmatprep.subr.mxu0 0.0
    %1425 = vmatpush1.msra.mxu0 %v1368
    %1426 = vmatprep.subr.mxu0 0.0
    %1427 = vmatpush1.msra.mxu0 0.0
    %1428 = vmatprep.subr.mxu0 0.0
    %1429 = vmatpush1.msra.mxu0 0.0
    %1430 = vmatprep.subr.mxu0 0.0
    %1431 = vmatpush1.msra.mxu0 0.0
    %1432 = vmatprep.subr.mxu0 0.0
    %1433 = vmatpush1.msra.mxu0 0.0
    %1434 = vmatprep.subr.mxu0 0.0
    %1435 = vmatpush1.msra.mxu0 0.0
    %1436 = vmatprep.subr.mxu0 0.0
    %1437 = vmatpush1.msra.mxu0 0.0
    %1438 = vmatprep.subr.mxu0 0.0
    %1439 = vmatpush1.msra.mxu0 0.0
    %1440 = vmatprep.subr.mxu0 0.0
    %1441 = vmatpush1.msra.mxu0 0.0
    %1442 = vmatprep.subr.mxu0 0.0
    %1443 = vmatpush1.msra.mxu0 0.0
    %1444 = vmatprep.subr.mxu0 0.0
    %1445 = vmatpush1.msra.mxu0 0.0
    %1446 = vmatprep.subr.mxu0 0.0
    %1447 = vmatpush1.msra.mxu0 0.0
    %1448 = vmatprep.subr.mxu0 0.0
    %1449 = vmatpush1.msra.mxu0 0.0
    %1450 = vmatprep.subr.mxu0 0.0
    %1451 = vmatpush1.msra.mxu0 0.0
    %1452 = vmatprep.subr.mxu0 0.0
    %1453 = vmatpush1.msra.mxu0 0.0
    %1454 = vmatprep.subr.mxu0 0.0
    %1455 = vmatpush1.msra.mxu0 0.0
    %1456 = vmatprep.subr.mxu0 0.0
    %1457 = vmatpush1.msra.mxu0 0.0
    %1458 = vmatprep.subr.mxu0 0.0
    %1459 = vmatpush1.msra.mxu0 0.0
    %1460 = vmatprep.subr.mxu0 0.0
    %1461 = vmatpush1.msra.mxu0 0.0
    %1462 = vmatprep.subr.mxu0 0.0
    %1463 = vmatpush1.msra.mxu0 0.0
    %1464 = vmatprep.subr.mxu0 0.0
    %1465 = vmatpush1.msra.mxu0 0.0
    %1466 = vmatprep.subr.mxu0 0.0
    %1467 = vmatpush1.msra.mxu0 0.0
    %1468 = vmatprep.subr.mxu0 0.0
    %1469 = vmatpush1.msra.mxu0 0.0
    %1470 = vmatprep.subr.mxu0 0.0
    %1471 = vmatpush1.msra.mxu0 0.0
    %1472 = vmatprep.subr.mxu0 0.0
    %1473 = vmatpush1.msra.mxu0 0.0
    %1474 = vmatprep.mubr.f32.mxu0 0.0
    %1475 = vmatmul.mubr.f32.gmra.mrb[0].mxu0 %v1399
    %v1476 = vpop.f32.mrb[0].mxu0
    %v1477 = vadd.f32 %v1380, %v1476
    %v1478 = vpop.f32.mrb[0].mxu0
    %1479 = vmatprep.mubr.f32.mxu0 0.0
    %1480 = vmatmul.mubr.f32.gmra.mrb[0].mxu0 %v1402
    %v1481 = vpop.f32.mrb[0].mxu0
    %v1482 = vadd.f32 %v1385, %v1481
    %v1483 = vpop.f32.mrb[0].mxu0
    %1484 = vmatprep.mubr.f32.mxu0 0.0
    %1485 = vmatmul.mubr.f32.gmra.mrb[0].mxu0 %v1405
    %v1486 = vpop.f32.mrb[0].mxu0
    %v1487 = vadd.f32 %v1390, %v1486
    %v1488 = vpop.f32.mrb[0].mxu0
    %1489 = vmatprep.mubr.f32.mxu0 0.0
    %1490 = vmatmul.mubr.f32.gmra.mrb[0].mxu0 %v1408
    %v1491 = vpop.f32.mrb[0].mxu0
    %v1492 = vadd.f32 %v1395, %v1491
    %v1493 = vpop.f32.mrb[0].mxu0
    %1494 = vdwg.mxu0
    %v1495 = vmax.f32 %v1477, 0.0
    %v1496 = vmax.f32 %v1482, 0.0
    %v1497 = vmax.f32 %v1487, 0.0
    %v1498 = vmax.f32 %v1492, 0.0
    %v1499 = vld [vmem:[%s9] sm:$0xff]
    %v1500 = vld [vmem:[%s9 + $0x8] sm:$0xff]
    %v1501 = vld [vmem:[%s9 + $0x10] sm:$0xff]
    %v1502 = vld [vmem:[%s9 + $0x18] sm:$0xff]
    %v1503 = vld [vmem:[%s9 + $0x20] sm:$0xff]
    %v1504 = vld [vmem:[%s9 + $0x28] sm:$0xff]
    %v1505 = vld [vmem:[%s9 + $0x30] sm:$0xff]
    %v1506 = vld [vmem:[%s9 + $0x38] sm:$0xff]
    %v1507 = vld [vmem:[%s9 + $0x40] sm:$0xff]
    %v1508 = vld [vmem:[%s9 + $0x48] sm:$0xff]
    %v1509 = vld [vmem:[%s9 + $0x50] sm:$0xff]
    %v1510 = vld [vmem:[%s9 + $0x58] sm:$0xff]
    %v1511 = vld [vmem:[%s9 + $0x60] sm:$0xff]
    %v1512 = vld [vmem:[%s9 + $0x68] sm:$0xff]
    %v1513 = vld [vmem:[%s9 + $0x70] sm:$0xff]
    %v1514 = vld [vmem:[%s9 + $0x78] sm:$0xff]
    %v1515 = vld [vmem:[%s10] sm:$0xff]
    %v1516 = vld [vmem:[%s10 + $0x8] sm:$0xff]
    %v1517 = vld [vmem:[%s10 + $0x10] sm:$0xff]
    %v1518 = vld [vmem:[%s10 + $0x18] sm:$0xff]
    %v1519 = vld [vmem:[%s10 + $0x20] sm:$0xff]
    %v1520 = vld [vmem:[%s10 + $0x28] sm:$0xff]
    %v1521 = vld [vmem:[%s10 + $0x30] sm:$0xff]
    %v1522 = vld [vmem:[%s10 + $0x38] sm:$0xff]
    %v1523 = vld [vmem:[%s10 + $0x40] sm:$0xff]
    %v1524 = vld [vmem:[%s10 + $0x48] sm:$0xff]
    %v1525 = vld [vmem:[%s10 + $0x50] sm:$0xff]
    %v1526 = vld [vmem:[%s10 + $0x58] sm:$0xff]
    %v1527 = vld [vmem:[%s10 + $0x60] sm:$0xff]
    %v1528 = vld [vmem:[%s10 + $0x68] sm:$0xff]
    %v1529 = vld [vmem:[%s10 + $0x70] sm:$0xff]
    %v1530 = vld [vmem:[%s10 + $0x78] sm:$0xff]
    %1532 = vset.pattern.permute.xlu0 0
    %1533 = vperm.xlu0 %1532, %v1515
    %v1534 = vpop.permute.xlu0 %1533
    %1537 = vset.pattern.permute.xlu0 0
    %1538 = vperm.xlu0 %1537, %v1516
    %v1539 = vpop.permute.xlu0 %1538
    %1542 = vset.pattern.permute.xlu0 0
    %1543 = vperm.xlu0 %1542, %v1517
    %v1544 = vpop.permute.xlu0 %1543
    %1547 = vset.pattern.permute.xlu0 0
    %1548 = vperm.xlu0 %1547, %v1518
    %v1549 = vpop.permute.xlu0 %1548
    %1552 = vset.pattern.permute.xlu0 0
    %1553 = vperm.xlu0 %1552, %v1519
    %v1554 = vpop.permute.xlu0 %1553
    %1557 = vset.pattern.permute.xlu0 0
    %1558 = vperm.xlu0 %1557, %v1520
    %v1559 = vpop.permute.xlu0 %1558
    %1562 = vset.pattern.permute.xlu0 0
    %1563 = vperm.xlu0 %1562, %v1521
    %v1564 = vpop.permute.xlu0 %1563
    %1567 = vset.pattern.permute.xlu0 0
    %1568 = vperm.xlu0 %1567, %v1522
    %v1569 = vpop.permute.xlu0 %1568
    %1572 = vset.pattern.permute.xlu0 0
    %1573 = vperm.xlu0 %1572, %v1523
    %v1574 = vpop.permute.xlu0 %1573
    %1577 = vset.pattern.permute.xlu0 0
    %1578 = vperm.xlu0 %1577, %v1524
    %v1579 = vpop.permute.xlu0 %1578
    %1582 = vset.pattern.permute.xlu0 0
    %1583 = vperm.xlu0 %1582, %v1525
    %v1584 = vpop.permute.xlu0 %1583
    %1587 = vset.pattern.permute.xlu0 0
    %1588 = vperm.xlu0 %1587, %v1526
    %v1589 = vpop.permute.xlu0 %1588
    %1592 = vset.pattern.permute.xlu0 0
    %1593 = vperm.xlu0 %1592, %v1527
    %v1594 = vpop.permute.xlu0 %1593
    %1597 = vset.pattern.permute.xlu0 0
    %1598 = vperm.xlu0 %1597, %v1528
    %v1599 = vpop.permute.xlu0 %1598
    %1602 = vset.pattern.permute.xlu0 0
    %1603 = vperm.xlu0 %1602, %v1529
    %v1604 = vpop.permute.xlu0 %1603
    %1607 = vset.pattern.permute.xlu0 0
    %1608 = vperm.xlu0 %1607, %v1530
    %v1609 = vpop.permute.xlu0 %1608
    %vm1611 = vcmask 261120
    %v1613 = vsel %vm1611, %v1499, 0
    %v1616 = vsel %vm1611, %v1500, 0
    %v1619 = vsel %vm1611, %v1501, 0
    %v1622 = vsel %vm1611, %v1502, 0
    %v1625 = vsel %vm1611, %v1503, 0
    %v1628 = vsel %vm1611, %v1504, 0
    %v1631 = vsel %vm1611, %v1505, 0
    %v1634 = vsel %vm1611, %v1506, 0
    %v1637 = vsel %vm1611, %v1507, 0
    %v1640 = vsel %vm1611, %v1508, 0
    %v1643 = vsel %vm1611, %v1509, 0
    %v1646 = vsel %vm1611, %v1510, 0
    %v1649 = vsel %vm1611, %v1511, 0
    %v1652 = vsel %vm1611, %v1512, 0
    %v1655 = vsel %vm1611, %v1513, 0
    %v1658 = vsel %vm1611, %v1514, 0
    %1660 = vmatprep.subr.mxu0 0.0
    %1661 = vmatpush1.msra.mxu0 %v1495
    %1662 = vmatprep.subr.mxu0 0.0
    %1663 = vmatpush1.msra.mxu0 %v1496
    %1664 = vmatprep.subr.mxu0 0.0
    %1665 = vmatpush1.msra.mxu0 %v1497
    %1666 = vmatprep.subr.mxu0 0.0
    %1667 = vmatpush1.msra.mxu0 %v1498
    %1668 = vmatprep.subr.mxu0 0.0
    %1669 = vmatpush1.msra.mxu0 0.0
    %1670 = vmatprep.subr.mxu0 0.0
    %1671 = vmatpush1.msra.mxu0 0.0
    %1672 = vmatprep.subr.mxu0 0.0
    %1673 = vmatpush1.msra.mxu0 0.0
    %1674 = vmatprep.subr.mxu0 0.0
    %1675 = vmatpush1.msra.mxu0 0.0
    %1676 = vmatprep.subr.mxu0 0.0
    %1677 = vmatpush1.msra.mxu0 0.0
    %1678 = vmatprep.subr.mxu0 0.0
    %1679 = vmatpush1.msra.mxu0 0.0
    %1680 = vmatprep.subr.mxu0 0.0
    %1681 = vmatpush1.msra.mxu0 0.0
    %1682 = vmatprep.subr.mxu0 0.0
    %1683 = vmatpush1.msra.mxu0 0.0
    %1684 = vmatprep.subr.mxu0 0.0
    %1685 = vmatpush1.msra.mxu0 0.0
    %1686 = vmatprep.subr.mxu0 0.0
    %1687 = vmatpush1.msra.mxu0 0.0
    %1688 = vmatprep.subr.mxu0 0.0
    %1689 = vmatpush1.msra.mxu0 0.0
    %1690 = vmatprep.subr.mxu0 0.0
    %1691 = vmatpush1.msra.mxu0 0.0
    %1692 = vmatprep.subr.mxu0 0.0
    %1693 = vmatpush1.msra.mxu0 0.0
    %1694 = vmatprep.subr.mxu0 0.0
    %1695 = vmatpush1.msra.mxu0 0.0
    %1696 = vmatprep.subr.mxu0 0.0
    %1697 = vmatpush1.msra.mxu0 0.0
    %1698 = vmatprep.subr.mxu0 0.0
    %1699 = vmatpush1.msra.mxu0 0.0
    %1700 = vmatprep.subr.mxu0 0.0
    %1701 = vmatpush1.msra.mxu0 0.0
    %1702 = vmatprep.subr.mxu0 0.0
    %1703 = vmatpush1.msra.mxu0 0.0
    %1704 = vmatprep.subr.mxu0 0.0
    %1705 = vmatpush1.msra.mxu0 0.0
    %1706 = vmatprep.subr.mxu0 0.0
    %1707 = vmatpush1.msra.mxu0 0.0
    %1708 = vmatprep.subr.mxu0 0.0
    %1709 = vmatpush1.msra.mxu0 0.0
    %1710 = vmatprep.subr.mxu0 0.0
    %1711 = vmatpush1.msra.mxu0 0.0
    %1712 = vmatprep.subr.mxu0 0.0
    %1713 = vmatpush1.msra.mxu0 0.0
    %1714 = vmatprep.subr.mxu0 0.0
    %1715 = vmatpush1.msra.mxu0 0.0
    %1716 = vmatprep.subr.mxu0 0.0
    %1717 = vmatpush1.msra.mxu0 0.0
    %1718 = vmatprep.subr.mxu0 0.0
    %1719 = vmatpush1.msra.mxu0 0.0
    %1720 = vmatprep.subr.mxu0 0.0
    %1721 = vmatpush1.msra.mxu0 0.0
    %1722 = vmatprep.subr.mxu0 0.0
    %1723 = vmatpush1.msra.mxu0 0.0
    %1724 = vmatprep.mubr.f32.mxu0 0.0
    %1725 = vmatmul.mubr.f32.gmra.mrb[0].mxu0 %v1613
    %v1726 = vpop.f32.mrb[0].mxu0
    %v1727 = vadd.f32 %v1534, %v1726
    %v1728 = vpop.f32.mrb[0].mxu0
    %1729 = vmatprep.mubr.f32.mxu0 0.0
    %1730 = vmatmul.mubr.f32.gmra.mrb[0].mxu0 %v1616
    %v1731 = vpop.f32.mrb[0].mxu0
    %v1732 = vadd.f32 %v1539, %v1731
    %v1733 = vpop.f32.mrb[0].mxu0
    %1734 = vmatprep.mubr.f32.mxu0 0.0
    %1735 = vmatmul.mubr.f32.gmra.mrb[0].mxu0 %v1619
    %v1736 = vpop.f32.mrb[0].mxu0
    %v1737 = vadd.f32 %v1544, %v1736
    %v1738 = vpop.f32.mrb[0].mxu0
    %1739 = vmatprep.mubr.f32.mxu0 0.0
    %1740 = vmatmul.mubr.f32.gmra.mrb[0].mxu0 %v1622
    %v1741 = vpop.f32.mrb[0].mxu0
    %v1742 = vadd.f32 %v1549, %v1741
    %v1743 = vpop.f32.mrb[0].mxu0
    %1744 = vmatprep.mubr.f32.mxu0 0.0
    %1745 = vmatmul.mubr.f32.gmra.mrb[0].mxu0 %v1625
    %v1746 = vpop.f32.mrb[0].mxu0
    %v1747 = vadd.f32 %v1554, %v1746
    %v1748 = vpop.f32.mrb[0].mxu0
    %1749 = vmatprep.mubr.f32.mxu0 0.0
    %1750 = vmatmul.mubr.f32.gmra.mrb[0].mxu0 %v1628
    %v1751 = vpop.f32.mrb[0].mxu0
    %v1752 = vadd.f32 %v1559, %v1751
    %v1753 = vpop.f32.mrb[0].mxu0
    %1754 = vmatprep.mubr.f32.mxu0 0.0
    %1755 = vmatmul.mubr.f32.gmra.mrb[0].mxu0 %v1631
    %v1756 = vpop.f32.mrb[0].mxu0
    %v1757 = vadd.f32 %v1564, %v1756
    %v1758 = vpop.f32.mrb[0].mxu0
    %1759 = vmatprep.mubr.f32.mxu0 0.0
    %1760 = vmatmul.mubr.f32.gmra.mrb[0].mxu0 %v1634
    %v1761 = vpop.f32.mrb[0].mxu0
    %v1762 = vadd.f32 %v1569, %v1761
    %v1763 = vpop.f32.mrb[0].mxu0
    %1764 = vmatprep.mubr.f32.mxu0 0.0
    %1765 = vmatmul.mubr.f32.gmra.mrb[0].mxu0 %v1637
    %v1766 = vpop.f32.mrb[0].mxu0
    %v1767 = vadd.f32 %v1574, %v1766
    %v1768 = vpop.f32.mrb[0].mxu0
    %1769 = vmatprep.mubr.f32.mxu0 0.0
    %1770 = vmatmul.mubr.f32.gmra.mrb[0].mxu0 %v1640
    %v1771 = vpop.f32.mrb[0].mxu0
    %v1772 = vadd.f32 %v1579, %v1771
    %v1773 = vpop.f32.mrb[0].mxu0
    %1774 = vmatprep.mubr.f32.mxu0 0.0
    %1775 = vmatmul.mubr.f32.gmra.mrb[0].mxu0 %v1643
    %v1776 = vpop.f32.mrb[0].mxu0
    %v1777 = vadd.f32 %v1584, %v1776
    %v1778 = vpop.f32.mrb[0].mxu0
    %1779 = vmatprep.mubr.f32.mxu0 0.0
    %1780 = vmatmul.mubr.f32.gmra.mrb[0].mxu0 %v1646
    %v1781 = vpop.f32.mrb[0].mxu0
    %v1782 = vadd.f32 %v1589, %v1781
    %v1783 = vpop.f32.mrb[0].mxu0
    %1784 = vmatprep.mubr.f32.mxu0 0.0
    %1785 = vmatmul.mubr.f32.gmra.mrb[0].mxu0 %v1649
    %v1786 = vpop.f32.mrb[0].mxu0
    %v1787 = vadd.f32 %v1594, %v1786
    %v1788 = vpop.f32.mrb[0].mxu0
    %1789 = vmatprep.mubr.f32.mxu0 0.0
    %1790 = vmatmul.mubr.f32.gmra.mrb[0].mxu0 %v1652
    %v1791 = vpop.f32.mrb[0].mxu0
    %v1792 = vadd.f32 %v1599, %v1791
    %v1793 = vpop.f32.mrb[0].mxu0
    %1794 = vmatprep.mubr.f32.mxu0 0.0
    %1795 = vmatmul.mubr.f32.gmra.mrb[0].mxu0 %v1655
    %v1796 = vpop.f32.mrb[0].mxu0
    %v1797 = vadd.f32 %v1604, %v1796
    %v1798 = vpop.f32.mrb[0].mxu0
    %1799 = vmatprep.mubr.f32.mxu0 0.0
    %1800 = vmatmul.mubr.f32.gmra.mrb[0].mxu0 %v1658
    %v1801 = vpop.f32.mrb[0].mxu0
    %v1802 = vadd.f32 %v1609, %v1801
    %v1803 = vpop.f32.mrb[0].mxu0
    %1804 = vdwg.mxu0
    %1805 = vxpose.xlu0.b32.start [1/16] %v1727, 128
    %1806 = vxpose.xlu0.b32.cont [2/16] %v1732, 128
    %1807 = vxpose.xlu0.b32.cont [3/16] %v1737, 128
    %1808 = vxpose.xlu0.b32.cont [4/16] %v1742, 128
    %1809 = vxpose.xlu0.b32.cont [5/16] %v1747, 128
    %1810 = vxpose.xlu0.b32.cont [6/16] %v1752, 128
    %1811 = vxpose.xlu0.b32.cont [7/16] %v1757, 128
    %1812 = vxpose.xlu0.b32.cont [8/16] %v1762, 128
    %1813 = vxpose.xlu0.b32.cont [9/16] %v1767, 128
    %1814 = vxpose.xlu0.b32.cont [10/16] %v1772, 128
    %1815 = vxpose.xlu0.b32.cont [11/16] %v1777, 128
    %1816 = vxpose.xlu0.b32.cont [12/16] %v1782, 128
    %1817 = vxpose.xlu0.b32.cont [13/16] %v1787, 128
    %1818 = vxpose.xlu0.b32.cont [14/16] %v1792, 128
    %1819 = vxpose.xlu0.b32.cont [15/16] %v1797, 128
    %1820 = vxpose.xlu0.b32.end [16/16] %v1802, 128
    %v1821 = vpop.trf.xlu0
    %v1822 = vpop.trf.xlu0
    %v1823 = vpop.trf.xlu0
    %v1824 = vpop.trf.xlu0
    %v1825 = vpop.trf.xlu0
    %v1826 = vpop.trf.xlu0
    %v1827 = vpop.trf.xlu0
    %v1828 = vpop.trf.xlu0
    %v1829 = vpop.trf.xlu0
    %v1830 = vpop.trf.xlu0
    %v1831 = vpop.trf.xlu0
    %v1832 = vpop.trf.xlu0
    %v1833 = vpop.trf.xlu0
    %v1834 = vpop.trf.xlu0
    %v1835 = vpop.trf.xlu0
    %v1836 = vpop.trf.xlu0
    %v1837 = vld [vmem:[%s11] sm:$0xff]
    %v1838 = vld [vmem:[%s11 + $0x8] sm:$0xff]
    %v1839 = vld [vmem:[%s11 + $0x10] sm:$0xff]
    %v1840 = vld [vmem:[%s11 + $0x18] sm:$0xff]
    %v1841 = vld [vmem:[%s11 + $0x20] sm:$0xff]
    %v1842 = vld [vmem:[%s11 + $0x28] sm:$0xff]
    %v1843 = vld [vmem:[%s11 + $0x30] sm:$0xff]
    %v1844 = vld [vmem:[%s11 + $0x38] sm:$0xff]
    %v1845 = vld [vmem:[%s11 + $0x40] sm:$0xff]
    %v1846 = vld [vmem:[%s11 + $0x48] sm:$0xff]
    %v1847 = vld [vmem:[%s11 + $0x50] sm:$0xff]
    %v1848 = vld [vmem:[%s11 + $0x58] sm:$0xff]
    %v1849 = vld [vmem:[%s11 + $0x60] sm:$0xff]
    %v1850 = vld [vmem:[%s11 + $0x68] sm:$0xff]
    %v1851 = vld [vmem:[%s11 + $0x70] sm:$0xff]
    %v1852 = vld [vmem:[%s11 + $0x78] sm:$0xff]
    %v1853 = vld [vmem:[%s12] sm:$0x1]
    %v1855 = vlaneseq
    %v1856 = vshrl.u32 %v1855, 7
    %v1857 = vsub.s32 0, %v1856
    %v1858 = vrot.slane %v1853, %v1857
    %1860 = vmatprep.subr.mxu0 0.0
    %1861 = vmatpush1.msra.mxu0 %v1837
    %1862 = vmatprep.subr.mxu0 0.0
    %1863 = vmatpush1.msra.mxu0 %v1838
    %1864 = vmatprep.subr.mxu0 0.0
    %1865 = vmatpush1.msra.mxu0 %v1839
    %1866 = vmatprep.subr.mxu0 0.0
    %1867 = vmatpush1.msra.mxu0 %v1840
    %1868 = vmatprep.subr.mxu0 0.0
    %1869 = vmatpush1.msra.mxu0 %v1841
    %1870 = vmatprep.subr.mxu0 0.0
    %1871 = vmatpush1.msra.mxu0 %v1842
    %1872 = vmatprep.subr.mxu0 0.0
    %1873 = vmatpush1.msra.mxu0 %v1843
    %1874 = vmatprep.subr.mxu0 0.0
    %1875 = vmatpush1.msra.mxu0 %v1844
    %1876 = vmatprep.subr.mxu0 0.0
    %1877 = vmatpush1.msra.mxu0 %v1845
    %1878 = vmatprep.subr.mxu0 0.0
    %1879 = vmatpush1.msra.mxu0 %v1846
    %1880 = vmatprep.subr.mxu0 0.0
    %1881 = vmatpush1.msra.mxu0 %v1847
    %1882 = vmatprep.subr.mxu0 0.0
    %1883 = vmatpush1.msra.mxu0 %v1848
    %1884 = vmatprep.subr.mxu0 0.0
    %1885 = vmatpush1.msra.mxu0 %v1849
    %1886 = vmatprep.subr.mxu0 0.0
    %1887 = vmatpush1.msra.mxu0 %v1850
    %1888 = vmatprep.subr.mxu0 0.0
    %1889 = vmatpush1.msra.mxu0 %v1851
    %1890 = vmatprep.subr.mxu0 0.0
    %1891 = vmatpush1.msra.mxu0 %v1852
    %1892 = vmatprep.subr.mxu0 0.0
    %1893 = vmatpush1.msra.mxu0 0.0
    %1894 = vmatprep.subr.mxu0 0.0
    %1895 = vmatpush1.msra.mxu0 0.0
    %1896 = vmatprep.subr.mxu0 0.0
    %1897 = vmatpush1.msra.mxu0 0.0
    %1898 = vmatprep.subr.mxu0 0.0
    %1899 = vmatpush1.msra.mxu0 0.0
    %1900 = vmatprep.subr.mxu0 0.0
    %1901 = vmatpush1.msra.mxu0 0.0
    %1902 = vmatprep.subr.mxu0 0.0
    %1903 = vmatpush1.msra.mxu0 0.0
    %1904 = vmatprep.subr.mxu0 0.0
    %1905 = vmatpush1.msra.mxu0 0.0
    %1906 = vmatprep.subr.mxu0 0.0
    %1907 = vmatpush1.msra.mxu0 0.0
    %1908 = vmatprep.subr.mxu0 0.0
    %1909 = vmatpush1.msra.mxu0 0.0
    %1910 = vmatprep.subr.mxu0 0.0
    %1911 = vmatpush1.msra.mxu0 0.0
    %1912 = vmatprep.subr.mxu0 0.0
    %1913 = vmatpush1.msra.mxu0 0.0
    %1914 = vmatprep.subr.mxu0 0.0
    %1915 = vmatpush1.msra.mxu0 0.0
    %1916 = vmatprep.subr.mxu0 0.0
    %1917 = vmatpush1.msra.mxu0 0.0
    %1918 = vmatprep.subr.mxu0 0.0
    %1919 = vmatpush1.msra.mxu0 0.0
    %1920 = vmatprep.subr.mxu0 0.0
    %1921 = vmatpush1.msra.mxu0 0.0
    %1922 = vmatprep.subr.mxu0 0.0
    %1923 = vmatpush1.msra.mxu0 0.0
    %1924 = vmatprep.mubr.f32.mxu0 0.0
    %1925 = vmatmul.mubr.f32.gmra.mrb[0].mxu0 %v1821
    %v1926 = vpop.f32.mrb[0].mxu0
    %v1927 = vadd.f32 %v1858, %v1926
    %v1928 = vpop.f32.mrb[0].mxu0
    %1929 = vdwg.mxu0
    %1930 = vst [vmem:[#allocation2] sm:$0x3] %v1927
    // Predicated region
    $region54: #{cnn1d_forward.1} parent=1 // pred_check
      _
    $region55: #{cnn1d_forward.1} parent=1 // pred_check_branch
      %1932 = sbr.rel (0) target = $region57
    $region56: #{cnn1d_forward.1} parent=1 // pred_region
      %s1934 = ssub.s32 32, 32
      %1935 = vsyncadd [#allocation3], %s1934
      %s1937 = sshll.u32 [#allocation2], 4
      %s1938 = int_to_ptr.vmem [resolvable:$true] %s1937
      %1940 = dma.vmem_to_hbm [thread:$0]  %s1938, 32, %s13, [#allocation3]
    $region57: #{cnn1d_forward.1} parent=1 // pred_fallthru
      _
    // Predicated region
    $region58: #{cnn1d_forward.1} parent=1 // pred_check
      _
    $region59: #{cnn1d_forward.1} parent=1 // pred_check_branch
      %1942 = sbr.rel (0) target = $region61
    $region60: #{cnn1d_forward.1} parent=1 // pred_region
      %1943 = dma.done [#allocation3], 32
    $region61: #{cnn1d_forward.1} parent=1 // pred_fallthru
      _
    %1944 = vsyncpa [#allocation3], 1

</llo_original>
